<compile_context>
chip_gen: v7x
topology: tpu7x:2x2x1
jax: 0.10.0
libtpu: 0.0.40
codegen_flags: <defaults>
</compile_context>

<pallas_src>
import functools

import jax
import jax.numpy as jnp
from jax.experimental import pallas as pl
from jax.experimental.pallas import tpu as pltpu


def basic_block_kernel(xpad_ref, x_ref, w1_ref, b1_ref, w2_ref, b2_ref,
                       o_ref, a1pad_ref, *, block_h):
    """One batch element per grid step.

    xpad_ref:   (H+2, W+2, Cin)   zero-padded NHWC input (conv1 taps)
    x_ref:      (H, W, Cin)       unpadded input (residual, aligned DMA)
    w1_ref:     (9*Cin, Cout)     conv1 weights, BN1 scale folded in
    b1_ref:     (1, Cout)         folded BN1 bias
    w2_ref:     (9*Cout, Cout)    conv2 weights, BN2 scale folded in
    b2_ref:     (1, Cout)         folded BN2 bias
    o_ref:      (H, W, Cout)
    a1pad_ref:  (H+2, W+2, Cout)  VMEM scratch: padded relu(bn1(conv1(x)))
    """
    Hp, Wp, Cin = xpad_ref.shape
    H, W = Hp - 2, Wp - 2
    Cout = o_ref.shape[-1]
    BH = block_h
    n_slabs = H // BH

    # Zero only the 1-wide halo of the padded intermediate; the interior is
    # fully overwritten below, so no full-tensor zero fill / reload is needed.
    zrow = jnp.zeros((1, Wp, Cout), a1pad_ref.dtype)
    zcol = jnp.zeros((Hp, 1, Cout), a1pad_ref.dtype)
    a1pad_ref[0:1, :, :] = zrow
    a1pad_ref[H + 1:H + 2, :, :] = zrow
    a1pad_ref[:, 0:1, :] = zcol
    a1pad_ref[:, W + 1:W + 2, :] = zcol

    w1 = w1_ref[...]                        # (9*Cin, Cout)
    b1 = b1_ref[...].astype(jnp.float32)    # (1, Cout)
    w2 = w2_ref[...]                        # (9*Cout, Cout)
    b2 = b2_ref[...].astype(jnp.float32)    # (1, Cout)

    def im2col(slab, c):
        # slab: (BH+2, W+2, c) -> (BH*W, 9*c); tap order (dy, dx, c) matches
        # the HWIO -> (9*c, Cout) weight reshape done in the wrapper.
        s = slab.astype(jnp.float32)        # keep concat/elementwise in f32
        taps = [s[dy:dy + BH, dx:dx + W, :]
                for dy in range(3) for dx in range(3)]
        return jnp.concatenate(taps, axis=-1).reshape(BH * W, 9 * c)

    # ---- pass 1: conv1 (3x3) -> +bias -> ReLU, into the padded scratch -----
    def conv1_slab(r, carry):
        r0 = pl.multiple_of(r * BH, BH)
        xs = xpad_ref[pl.ds(r0, BH + 2), :, :]                # (BH+2, W+2, Cin)
        patches = im2col(xs, Cin).astype(w1.dtype)
        acc = jnp.dot(patches, w1, preferred_element_type=jnp.float32)
        a1 = jnp.maximum(acc + b1, 0.0).reshape(BH, W, Cout)
        a1pad_ref[pl.ds(r0 + 1, BH), 1:W + 1, :] = a1.astype(a1pad_ref.dtype)
        return carry

    jax.lax.fori_loop(0, n_slabs, conv1_slab, 0)

    # ---- pass 2: conv2 (3x3) -> +bias -> +identity -> ReLU ------------------
    def conv2_slab(r, carry):
        r0 = pl.multiple_of(r * BH, BH)
        a1s = a1pad_ref[pl.ds(r0, BH + 2), :, :]              # (BH+2, W+2, Cout)
        patches = im2col(a1s, Cout).astype(w2.dtype)
        acc = jnp.dot(patches, w2, preferred_element_type=jnp.float32)
        idn = x_ref[pl.ds(r0, BH), :, :].astype(jnp.float32).reshape(BH * W, Cin)
        out = jnp.maximum(acc + b2 + idn, 0.0)
        o_ref[pl.ds(r0, BH), :, :] = out.reshape(BH, W, Cout).astype(o_ref.dtype)
        return carry

    jax.lax.fori_loop(0, n_slabs, conv2_slab, 0)


@functools.partial(jax.jit, static_argnames=("eps", "compute_dtype"))
def basic_block(x_nchw, w1, g1, be1, m1, v1, w2, g2, be2, m2, v2,
                eps=1e-5, compute_dtype=jnp.float32):
    """Wrapper: NCHW in / NCHW out, PyTorch OIHW conv weights, eval-mode BN."""
    N, Cin, H, W = x_nchw.shape
    Cout = w1.shape[0]
    if Cin != Cout:
        raise ValueError("residual path requires inplanes == planes "
                         "(stride=1, downsample=None)")

    # Fold eval-mode BatchNorm: scale into the conv weights, keep a bias.
    s1 = g1 / jnp.sqrt(v1 + eps)
    b1 = (be1 - m1 * s1).reshape(1, Cout)
    s2 = g2 / jnp.sqrt(v2 + eps)
    b2 = (be2 - m2 * s2).reshape(1, Cout)

    # OIHW -> HWIO, BN-scale the output channels, flatten for im2col matmul.
    w1_k = (jnp.transpose(w1 * s1[:, None, None, None], (2, 3, 1, 0))
            .reshape(9 * Cin, Cout).astype(compute_dtype))
    w2_k = (jnp.transpose(w2 * s2[:, None, None, None], (2, 3, 1, 0))
            .reshape(9 * Cout, Cout).astype(compute_dtype))

    x = jnp.transpose(x_nchw, (0, 2, 3, 1))                    # NCHW -> NHWC
    xpad = jnp.pad(x, ((0, 0), (1, 1), (1, 1), (0, 0))).astype(compute_dtype)

    # Row-slab height used by the in-kernel loops (bounds vreg/VMEM pressure).
    block_h = next(d for d in (8, 4, 2, 1) if H % d == 0)
    kernel = functools.partial(basic_block_kernel, block_h=block_h)

    out_nhwc = pl.pallas_call(
        kernel,
        out_shape=jax.ShapeDtypeStruct((N, H, W, Cout), x_nchw.dtype),
        grid=(N,),
        in_specs=[
            pl.BlockSpec((None, H + 2, W + 2, Cin), lambda n: (n, 0, 0, 0)),
            pl.BlockSpec((None, H, W, Cin), lambda n: (n, 0, 0, 0)),
            pl.BlockSpec((9 * Cin, Cout), lambda n: (0, 0)),
            pl.BlockSpec((1, Cout), lambda n: (0, 0)),
            pl.BlockSpec((9 * Cout, Cout), lambda n: (0, 0)),
            pl.BlockSpec((1, Cout), lambda n: (0, 0)),
        ],
        out_specs=pl.BlockSpec((None, H, W, Cout), lambda n: (n, 0, 0, 0)),
        scratch_shapes=[pltpu.VMEM((H + 2, W + 2, Cout), compute_dtype)],
        compiler_params=pltpu.CompilerParams(
            dimension_semantics=("parallel",),
            vmem_limit_bytes=48 * 1024 * 1024),
    )(xpad, x, w1_k, b1, w2_k, b2)

    return jnp.transpose(out_nhwc, (0, 3, 1, 2))               # NHWC -> NCHW


def ref_basic_block(x, w1, g1, be1, m1, v1, w2, g2, be2, m2, v2, eps=1e-5):
    """Pure-JAX reference (lax conv, NCHW) mirroring the PyTorch forward."""
    dn = ("NCHW", "OIHW", "NCHW")

    def bn(y, g, b, m, v):
        g = g[None, :, None, None]
        b = b[None, :, None, None]
        m = m[None, :, None, None]
        v = v[None, :, None, None]
        return (y - m) / jnp.sqrt(v + eps) * g + b

    y = jax.lax.conv_general_dilated(x, w1, (1, 1), ((1, 1), (1, 1)),
                                     dimension_numbers=dn)
    y = jnp.maximum(bn(y, g1, be1, m1, v1), 0.0)
    y = jax.lax.conv_general_dilated(y, w2, (1, 1), ((1, 1), (1, 1)),
                                     dimension_numbers=dn)
    y = bn(y, g2, be2, m2, v2)
    return jnp.maximum(y + x, 0.0)


if __name__ == "__main__":
    key = jax.random.PRNGKey(0)
    N, C, H, W = 2, 8, 16, 16        # inplanes == planes (residual path)
    planes = C

    ks = jax.random.split(key, 11)
    x = jax.random.normal(ks[0], (N, C, H, W), jnp.float32)
    w1 = jax.random.normal(ks[1], (planes, C, 3, 3), jnp.float32) * 0.1
    w2 = jax.random.normal(ks[2], (planes, planes, 3, 3), jnp.float32) * 0.1
    g1 = jax.random.uniform(ks[3], (planes,), jnp.float32, 0.5, 1.5)
    be1 = jax.random.normal(ks[4], (planes,), jnp.float32) * 0.1
    m1 = jax.random.normal(ks[5], (planes,), jnp.float32) * 0.1
    v1 = jax.random.uniform(ks[6], (planes,), jnp.float32, 0.5, 1.5)
    g2 = jax.random.uniform(ks[7], (planes,), jnp.float32, 0.5, 1.5)
    be2 = jax.random.normal(ks[8], (planes,), jnp.float32) * 0.1
    m2 = jax.random.normal(ks[9], (planes,), jnp.float32) * 0.1
    v2 = jax.random.uniform(ks[10], (planes,), jnp.float32, 0.5, 1.5)

    ref = ref_basic_block(x, w1, g1, be1, m1, v1, w2, g2, be2, m2, v2)

    # --- f32 path: strict correctness check ---
    out = basic_block(x, w1, g1, be1, m1, v1, w2, g2, be2, m2, v2)
    out = jax.block_until_ready(out)
    assert out.shape == (N, planes, H, W)
    assert jnp.allclose(out, ref, atol=1e-4, rtol=1e-4), \
        f"f32 max abs err {jnp.max(jnp.abs(out - ref))}"

    # --- bf16 matmul path (v6e/v7x MXU): loose tolerance sanity check ---
    out_bf16 = basic_block(x, w1, g1, be1, m1, v1, w2, g2, be2, m2, v2,
                           compute_dtype=jnp.bfloat16)
    out_bf16 = jax.block_until_ready(out_bf16)
    assert out_bf16.shape == (N, planes, H, W)
    assert jnp.allclose(out_bf16, ref, atol=1e-1, rtol=1e-1), \
        f"bf16 max abs err {jnp.max(jnp.abs(out_bf16 - ref))}"

    print("KERNEL_OK")
</pallas_src>

<mosaic_0001>
module attributes {stable_mosaic.version = 11 : i64} {
  func.func @basic_block_kernel(%arg0: i32, %arg1: memref<1x18x18x8xf32, #tpu.memory_space<vmem>>, %arg2: memref<1x16x16x8xf32, #tpu.memory_space<vmem>>, %arg3: memref<72x8xf32, #tpu.memory_space<vmem>>, %arg4: memref<1x8xf32, #tpu.memory_space<vmem>>, %arg5: memref<72x8xf32, #tpu.memory_space<vmem>>, %arg6: memref<1x8xf32, #tpu.memory_space<vmem>>, %arg7: memref<1x16x16x8xf32, #tpu.memory_space<vmem>>, %arg8: memref<18x18x8xf32, #tpu.memory_space<vmem>>) attributes {dimension_semantics = [#tpu.dimension_semantics<parallel>], iteration_bounds = array<i64: 2>, scalar_prefetch = 0 : i64, scratch_operands = 1 : i64, tpu.core_type = #tpu.core_type<tc>, window_params = [{transform_indices = @transform_0, window_bounds = array<i64: 1, 18, 18, 8>}, {transform_indices = @transform_1, window_bounds = array<i64: 1, 16, 16, 8>}, {pipeline_mode = #tpu.pipeline_mode<synchronous>, transform_indices = @transform_2, window_bounds = array<i64: 72, 8>}, {pipeline_mode = #tpu.pipeline_mode<synchronous>, transform_indices = @transform_3, window_bounds = array<i64: 1, 8>}, {pipeline_mode = #tpu.pipeline_mode<synchronous>, transform_indices = @transform_4, window_bounds = array<i64: 72, 8>}, {pipeline_mode = #tpu.pipeline_mode<synchronous>, transform_indices = @transform_5, window_bounds = array<i64: 1, 8>}, {transform_indices = @transform_6, window_bounds = array<i64: 1, 16, 16, 8>}]} {
    %cst = arith.constant 0.000000e+00 : f32
    %0 = vector.broadcast %cst : f32 to vector<1x18x8xf32>
    %cst_0 = arith.constant 0.000000e+00 : f32
    %1 = vector.broadcast %cst_0 : f32 to vector<18x1x8xf32>
    %c0 = arith.constant 0 : index
    %c0_1 = arith.constant 0 : index
    %c0_2 = arith.constant 0 : index
    %2 = vector.load %arg8[%c0, %c0_1, %c0_2] : memref<18x18x8xf32, #tpu.memory_space<vmem>>, vector<1x18x8xf32>
    tpu.vector_store %arg8[%c0, %c0_1, %c0_2], %0 {strides = array<i32>} : memref<18x18x8xf32, #tpu.memory_space<vmem>>, vector<1x18x8xf32>,
    %c17 = arith.constant 17 : index
    %c0_3 = arith.constant 0 : index
    %c0_4 = arith.constant 0 : index
    %3 = vector.load %arg8[%c17, %c0_3, %c0_4] : memref<18x18x8xf32, #tpu.memory_space<vmem>>, vector<1x18x8xf32>
    tpu.vector_store %arg8[%c17, %c0_3, %c0_4], %0 {strides = array<i32>} : memref<18x18x8xf32, #tpu.memory_space<vmem>>, vector<1x18x8xf32>,
    %c0_5 = arith.constant 0 : index
    %c0_6 = arith.constant 0 : index
    %c0_7 = arith.constant 0 : index
    %4 = vector.load %arg8[%c0_5, %c0_6, %c0_7] : memref<18x18x8xf32, #tpu.memory_space<vmem>>, vector<18x1x8xf32>
    tpu.vector_store %arg8[%c0_5, %c0_6, %c0_7], %1 {strides = array<i32>} : memref<18x18x8xf32, #tpu.memory_space<vmem>>, vector<18x1x8xf32>,
    %c0_8 = arith.constant 0 : index
    %c17_9 = arith.constant 17 : index
    %c0_10 = arith.constant 0 : index
    %5 = vector.load %arg8[%c0_8, %c17_9, %c0_10] : memref<18x18x8xf32, #tpu.memory_space<vmem>>, vector<18x1x8xf32>
    tpu.vector_store %arg8[%c0_8, %c17_9, %c0_10], %1 {strides = array<i32>} : memref<18x18x8xf32, #tpu.memory_space<vmem>>, vector<18x1x8xf32>,
    %c0_11 = arith.constant 0 : index
    %c0_12 = arith.constant 0 : index
    %6 = vector.load %arg3[%c0_11, %c0_12] : memref<72x8xf32, #tpu.memory_space<vmem>>, vector<72x8xf32>
    %c0_13 = arith.constant 0 : index
    %c0_14 = arith.constant 0 : index
    %7 = vector.load %arg4[%c0_13, %c0_14] : memref<1x8xf32, #tpu.memory_space<vmem>>, vector<1x8xf32>
    %c0_15 = arith.constant 0 : index
    %c0_16 = arith.constant 0 : index
    %8 = vector.load %arg5[%c0_15, %c0_16] : memref<72x8xf32, #tpu.memory_space<vmem>>, vector<72x8xf32>
    %c0_17 = arith.constant 0 : index
    %c0_18 = arith.constant 0 : index
    %9 = vector.load %arg6[%c0_17, %c0_18] : memref<1x8xf32, #tpu.memory_space<vmem>>, vector<1x8xf32>
    %c0_i32 = arith.constant 0 : i32
    %c2_i32 = arith.constant 2 : i32
    %10 = arith.addi %c0_i32, %c2_i32 : i32
    %c1_i32 = arith.constant 1 : i32
    scf.for %arg9 = %c0_i32 to %10 step %c1_i32  : i32 {
      %c8_i32 = arith.constant 8 : i32
      %12 = arith.muli %arg9, %c8_i32 : i32
      %13 = tpu.assume_multiple %12, 8 : i32
      %c0_24 = arith.constant 0 : index
      %14 = arith.index_cast %13 : i32 to index
      %c0_25 = arith.constant 0 : index
      %c0_26 = arith.constant 0 : index
      %15 = vector.load %arg1[%c0_24, %14, %c0_25, %c0_26] : memref<1x18x18x8xf32, #tpu.memory_space<vmem>>, vector<1x10x18x8xf32>
      %16 = vector.shape_cast %15 : vector<1x10x18x8xf32> to vector<10x18x8xf32>
      %17 = vector.extract_strided_slice %16 {offsets = [0, 0, 0], sizes = [8, 16, 8], strides = [1, 1, 1]} : vector<10x18x8xf32> to vector<8x16x8xf32>
      %18 = vector.extract_strided_slice %16 {offsets = [0, 1, 0], sizes = [8, 16, 8], strides = [1, 1, 1]} : vector<10x18x8xf32> to vector<8x16x8xf32>
      %19 = vector.extract_strided_slice %16 {offsets = [0, 2, 0], sizes = [8, 16, 8], strides = [1, 1, 1]} : vector<10x18x8xf32> to vector<8x16x8xf32>
      %20 = vector.extract_strided_slice %16 {offsets = [1, 0, 0], sizes = [8, 16, 8], strides = [1, 1, 1]} : vector<10x18x8xf32> to vector<8x16x8xf32>
      %21 = vector.extract_strided_slice %16 {offsets = [1, 1, 0], sizes = [8, 16, 8], strides = [1, 1, 1]} : vector<10x18x8xf32> to vector<8x16x8xf32>
      %22 = vector.extract_strided_slice %16 {offsets = [1, 2, 0], sizes = [8, 16, 8], strides = [1, 1, 1]} : vector<10x18x8xf32> to vector<8x16x8xf32>
      %23 = vector.extract_strided_slice %16 {offsets = [2, 0, 0], sizes = [8, 16, 8], strides = [1, 1, 1]} : vector<10x18x8xf32> to vector<8x16x8xf32>
      %24 = vector.extract_strided_slice %16 {offsets = [2, 1, 0], sizes = [8, 16, 8], strides = [1, 1, 1]} : vector<10x18x8xf32> to vector<8x16x8xf32>
      %25 = vector.extract_strided_slice %16 {offsets = [2, 2, 0], sizes = [8, 16, 8], strides = [1, 1, 1]} : vector<10x18x8xf32> to vector<8x16x8xf32>
      %26 = tpu.concatenate %17, %18, %19, %20, %21, %22, %23, %24, %25 in 2 : vector<8x16x8xf32>, vector<8x16x8xf32>, vector<8x16x8xf32>, vector<8x16x8xf32>, vector<8x16x8xf32>, vector<8x16x8xf32>, vector<8x16x8xf32>, vector<8x16x8xf32>, vector<8x16x8xf32> -> vector<8x16x72xf32>
      %27 = vector.shape_cast %26 : vector<8x16x72xf32> to vector<128x72xf32>
      %cst_27 = arith.constant dense<0.000000e+00> : vector<128x8xf32>
      %28 = tpu.matmul %27, %6, %cst_27 {dimension_numbers = #tpu.dot_dimension_numbers<[1], [0], [0], [1], [0, 0, 1, 1], [], []>} : vector<128x72xf32>, vector<72x8xf32>, vector<128x8xf32> -> vector<128x8xf32>
      %29 = vector.broadcast %7 : vector<1x8xf32> to vector<128x8xf32>
      %30 = arith.addf %28, %29 : vector<128x8xf32>
      %cst_28 = arith.constant 0.000000e+00 : f32
      %31 = vector.broadcast %cst_28 : f32 to vector<128x8xf32>
      %32 = arith.maximumf %30, %31 : vector<128x8xf32>
      %33 = vector.shape_cast %32 : vector<128x8xf32> to vector<8x16x8xf32>
      %c1_i32_29 = arith.constant 1 : i32
      %34 = arith.addi %13, %c1_i32_29 : i32
      %35 = arith.index_cast %34 : i32 to index
      %c1 = arith.constant 1 : index
      %c0_30 = arith.constant 0 : index
      %36 = vector.load %arg8[%35, %c1, %c0_30] : memref<18x18x8xf32, #tpu.memory_space<vmem>>, vector<8x16x8xf32>
      tpu.vector_store %arg8[%35, %c1, %c0_30], %33 {strides = array<i32>} : memref<18x18x8xf32, #tpu.memory_space<vmem>>, vector<8x16x8xf32>,
    }
    %c2_i32_19 = arith.constant 2 : i32
    %c0_i32_20 = arith.constant 0 : i32
    %c2_i32_21 = arith.constant 2 : i32
    %11 = arith.addi %c0_i32_20, %c2_i32_21 : i32
    %c1_i32_22 = arith.constant 1 : i32
    scf.for %arg9 = %c0_i32_20 to %11 step %c1_i32_22  : i32 {
      %c8_i32 = arith.constant 8 : i32
      %12 = arith.muli %arg9, %c8_i32 : i32
      %13 = tpu.assume_multiple %12, 8 : i32
      %14 = arith.index_cast %13 : i32 to index
      %c0_24 = arith.constant 0 : index
      %c0_25 = arith.constant 0 : index
      %15 = vector.load %arg8[%14, %c0_24, %c0_25] : memref<18x18x8xf32, #tpu.memory_space<vmem>>, vector<10x18x8xf32>
      %16 = vector.extract_strided_slice %15 {offsets = [0, 0, 0], sizes = [8, 16, 8], strides = [1, 1, 1]} : vector<10x18x8xf32> to vector<8x16x8xf32>
      %17 = vector.extract_strided_slice %15 {offsets = [0, 1, 0], sizes = [8, 16, 8], strides = [1, 1, 1]} : vector<10x18x8xf32> to vector<8x16x8xf32>
      %18 = vector.extract_strided_slice %15 {offsets = [0, 2, 0], sizes = [8, 16, 8], strides = [1, 1, 1]} : vector<10x18x8xf32> to vector<8x16x8xf32>
      %19 = vector.extract_strided_slice %15 {offsets = [1, 0, 0], sizes = [8, 16, 8], strides = [1, 1, 1]} : vector<10x18x8xf32> to vector<8x16x8xf32>
      %20 = vector.extract_strided_slice %15 {offsets = [1, 1, 0], sizes = [8, 16, 8], strides = [1, 1, 1]} : vector<10x18x8xf32> to vector<8x16x8xf32>
      %21 = vector.extract_strided_slice %15 {offsets = [1, 2, 0], sizes = [8, 16, 8], strides = [1, 1, 1]} : vector<10x18x8xf32> to vector<8x16x8xf32>
      %22 = vector.extract_strided_slice %15 {offsets = [2, 0, 0], sizes = [8, 16, 8], strides = [1, 1, 1]} : vector<10x18x8xf32> to vector<8x16x8xf32>
      %23 = vector.extract_strided_slice %15 {offsets = [2, 1, 0], sizes = [8, 16, 8], strides = [1, 1, 1]} : vector<10x18x8xf32> to vector<8x16x8xf32>
      %24 = vector.extract_strided_slice %15 {offsets = [2, 2, 0], sizes = [8, 16, 8], strides = [1, 1, 1]} : vector<10x18x8xf32> to vector<8x16x8xf32>
      %25 = tpu.concatenate %16, %17, %18, %19, %20, %21, %22, %23, %24 in 2 : vector<8x16x8xf32>, vector<8x16x8xf32>, vector<8x16x8xf32>, vector<8x16x8xf32>, vector<8x16x8xf32>, vector<8x16x8xf32>, vector<8x16x8xf32>, vector<8x16x8xf32>, vector<8x16x8xf32> -> vector<8x16x72xf32>
      %26 = vector.shape_cast %25 : vector<8x16x72xf32> to vector<128x72xf32>
      %cst_26 = arith.constant dense<0.000000e+00> : vector<128x8xf32>
      %27 = tpu.matmul %26, %8, %cst_26 {dimension_numbers = #tpu.dot_dimension_numbers<[1], [0], [0], [1], [0, 0, 1, 1], [], []>} : vector<128x72xf32>, vector<72x8xf32>, vector<128x8xf32> -> vector<128x8xf32>
      %c0_27 = arith.constant 0 : index
      %28 = arith.index_cast %13 : i32 to index
      %c0_28 = arith.constant 0 : index
      %c0_29 = arith.constant 0 : index
      %29 = vector.load %arg2[%c0_27, %28, %c0_28, %c0_29] : memref<1x16x16x8xf32, #tpu.memory_space<vmem>>, vector<1x8x16x8xf32>
      %30 = vector.shape_cast %29 : vector<1x8x16x8xf32> to vector<8x16x8xf32>
      %31 = vector.shape_cast %30 : vector<8x16x8xf32> to vector<128x8xf32>
      %32 = vector.broadcast %9 : vector<1x8xf32> to vector<128x8xf32>
      %33 = arith.addf %27, %32 : vector<128x8xf32>
      %34 = arith.addf %33, %31 : vector<128x8xf32>
      %cst_30 = arith.constant 0.000000e+00 : f32
      %35 = vector.broadcast %cst_30 : f32 to vector<128x8xf32>
      %36 = arith.maximumf %34, %35 : vector<128x8xf32>
      %37 = vector.shape_cast %36 : vector<128x8xf32> to vector<8x16x8xf32>
      %c0_31 = arith.constant 0 : index
      %38 = arith.index_cast %13 : i32 to index
      %c0_32 = arith.constant 0 : index
      %c0_33 = arith.constant 0 : index
      %39 = vector.load %arg7[%c0_31, %38, %c0_32, %c0_33] : memref<1x16x16x8xf32, #tpu.memory_space<vmem>>, vector<1x8x16x8xf32>
      %40 = vector.shape_cast %39 : vector<1x8x16x8xf32> to vector<8x16x8xf32>
      %41 = vector.shape_cast %37 : vector<8x16x8xf32> to vector<1x8x16x8xf32>
      tpu.vector_store %arg7[%c0_31, %38, %c0_32, %c0_33], %41 {strides = array<i32>} : memref<1x16x16x8xf32, #tpu.memory_space<vmem>>, vector<1x8x16x8xf32>,
    }
    %c2_i32_23 = arith.constant 2 : i32
    return
  }
  func.func @transform_0(%arg0: i32) -> (i32, i32, i32, i32) {
    %c0_i32 = arith.constant 0 : i32
    %c0_i32_0 = arith.constant 0 : i32
    %c0_i32_1 = arith.constant 0 : i32
    %c0_i32_2 = arith.constant 0 : i32
    return %arg0, %c0_i32, %c0_i32_0, %c0_i32_1 : i32, i32, i32, i32
  }
  func.func @transform_1(%arg0: i32) -> (i32, i32, i32, i32) {
    %c0_i32 = arith.constant 0 : i32
    %c0_i32_0 = arith.constant 0 : i32
    %c0_i32_1 = arith.constant 0 : i32
    %c0_i32_2 = arith.constant 0 : i32
    return %arg0, %c0_i32, %c0_i32_0, %c0_i32_1 : i32, i32, i32, i32
  }
  func.func @transform_2(%arg0: i32) -> (i32, i32) {
    %c0_i32 = arith.constant 0 : i32
    %c0_i32_0 = arith.constant 0 : i32
    %c0_i32_1 = arith.constant 0 : i32
    return %c0_i32, %c0_i32_0 : i32, i32
  }
  func.func @transform_3(%arg0: i32) -> (i32, i32) {
    %c0_i32 = arith.constant 0 : i32
    %c0_i32_0 = arith.constant 0 : i32
    %c0_i32_1 = arith.constant 0 : i32
    return %c0_i32, %c0_i32_0 : i32, i32
  }
  func.func @transform_4(%arg0: i32) -> (i32, i32) {
    %c0_i32 = arith.constant 0 : i32
    %c0_i32_0 = arith.constant 0 : i32
    %c0_i32_1 = arith.constant 0 : i32
    return %c0_i32, %c0_i32_0 : i32, i32
  }
  func.func @transform_5(%arg0: i32) -> (i32, i32) {
    %c0_i32 = arith.constant 0 : i32
    %c0_i32_0 = arith.constant 0 : i32
    %c0_i32_1 = arith.constant 0 : i32
    return %c0_i32, %c0_i32_0 : i32, i32
  }
  func.func @transform_6(%arg0: i32) -> (i32, i32, i32, i32) {
    %c0_i32 = arith.constant 0 : i32
    %c0_i32_0 = arith.constant 0 : i32
    %c0_i32_1 = arith.constant 0 : i32
    %c0_i32_2 = arith.constant 0 : i32
    return %arg0, %c0_i32, %c0_i32_0, %c0_i32_1 : i32, i32, i32, i32
  }
}

</mosaic_0001>

<llo_original>
// kernel: basic_block.1
$region0: #{basic_block.1}
  #allocation0 [shape = 'u32[]', space=smem, size = 0x4, offset = 0x4, fixed_abs, tag = 'smem constant byte address 0x4 - core index']
  #allocation1 [shape = 'u32[144,128]{1,0:T(1,128)}', space=vmem, size = 0x12000, scoped, tag = 'internal scratch']
  #allocation2 [shape = 'f32[18,18,8]{2,1,0:T(8,128)}', space=vmem, size = 0x36000, scoped, tag = 'scratch operand']
  %s0 = inlined_call_operand.vmem [shape: f32[2,18,18,8], index: 0, kind: input, shape index: {}]
  %s1 = inlined_call_operand.vmem [shape: f32[2,16,16,8], index: 1, kind: input, shape index: {}]
  %s2 = inlined_call_operand.vmem [shape: f32[72,8], index: 2, kind: input, shape index: {}]
  %s3 = inlined_call_operand.vmem [shape: f32[1,8], index: 3, kind: input, shape index: {}]
  %s4 = inlined_call_operand.vmem [shape: f32[72,8], index: 4, kind: input, shape index: {}]
  %s5 = inlined_call_operand.vmem [shape: f32[1,8], index: 5, kind: input, shape index: {}]
  %s6 = inlined_call_operand.vmem [shape: f32[2,16,16,8], index: 6, kind: output, shape index: {}]
  %s7 = sld [smem:[#allocation0]]
  $region71: #{basic_block.1} parent=0
    _
  %s9 = ssub.s32 1, %s7
  %s10 = scalar_select 0, %s9, %s7
  loop: start=0, step=1, limit=4
  $region2: #{basic_block.1} parent=0 // loop_pre_header
    _
  $region3: #{basic_block.1} parent=0 // loop_header
    %s12 = sphi 0, %s16
    %p13 = scmp.ge.s32.totalorder %s12, 4
    %s22 = sphi 0, %s24
    %s25 = sphi 0, %s22
    %s26 = sphi 0, %s25
    %s42 = sphi 0, %s26
    %s48 = sphi 0, %s50
    %s51 = sphi 0, %s48
    %s52 = sphi 0, %s51
    %s68 = sphi 0, %s52
    %s72 = sphi 0, %s72
    %s74 = sphi 0, %s72
    %s75 = sphi 0, %s74
    %s89 = sphi 0, %s75
    %s93 = sphi 0, %s93
    %s95 = sphi 0, %s93
    %s96 = sphi 0, %s95
    %s110 = sphi 0, %s96
    %s114 = sphi 0, %s114
    %s116 = sphi 0, %s114
    %s117 = sphi 0, %s116
    %s131 = sphi 0, %s117
    %s135 = sphi 0, %s135
    %s137 = sphi 0, %s135
    %s138 = sphi 0, %s137
    %s152 = sphi 0, %s138
    %s158 = sphi 0, %s160
    %s161 = sphi 0, %s158
    %s162 = sphi 0, %s161
    %s178 = sphi 0, %s162
  $region4: #{basic_block.1} parent=0 // loop_header_branch
    %15 = sbr.rel (%p13) target = $region8
  $region5: #{basic_block.1} parent=0 // loop_body
    %s17 = ssub.s32 %s12, 1
    %s18 = ssub.s32 %s12, 2
    %s19 = sadd.s32 %s12, 1
    %s20 = ssub.s32 %s12, %s19
    %p21 = scmp.eq.s32.totalorder %s20, 0
    %s23 = sadd.s32 %s22, 1
    %s24 = scalar_select %p21, %s22, %s23
    %p27 = pneg %p21
    %p28 = scmp.eq.s32.totalorder %s12, 1
    %p29 = por %p27, %p28
    %p30 = scmp.ne.s32.totalorder %s22, %s25
    %p31 = scmp.eq.s32.totalorder %s12, 0
    %p32 = por %p30, %p31
    %p33 = scmp.ne.s32.totalorder %s22, %s25
    %p34 = scmp.eq.s32.totalorder %s17, 1
    %p35 = por %p33, %p34
    %p36 = scmp.ne.s32.totalorder %s25, %s26
    %p37 = scmp.eq.s32.totalorder %s17, 0
    %p38 = por %p36, %p37
    %p39 = scmp.ne.s32.totalorder %s25, %s26
    %p40 = scmp.eq.s32.totalorder %s18, 1
    %p41 = por %p39, %p40
    %p43 = scmp.ne.s32.totalorder %s26, %s42
    %p44 = scmp.eq.s32.totalorder %s18, 0
    %p45 = por %p43, %p44
    %s46 = ssub.s32 %s12, %s19
    %p47 = scmp.eq.s32.totalorder %s46, 0
    %s49 = sadd.s32 %s48, 1
    %s50 = scalar_select %p47, %s48, %s49
    %p53 = pneg %p47
    %p54 = scmp.eq.s32.totalorder %s12, 1
    %p55 = por %p53, %p54
    %p56 = scmp.ne.s32.totalorder %s48, %s51
    %p57 = scmp.eq.s32.totalorder %s12, 0
    %p58 = por %p56, %p57
    %p59 = scmp.ne.s32.totalorder %s48, %s51
    %p60 = scmp.eq.s32.totalorder %s17, 1
    %p61 = por %p59, %p60
    %p62 = scmp.ne.s32.totalorder %s51, %s52
    %p63 = scmp.eq.s32.totalorder %s17, 0
    %p64 = por %p62, %p63
    %p65 = scmp.ne.s32.totalorder %s51, %s52
    %p66 = scmp.eq.s32.totalorder %s18, 1
    %p67 = por %p65, %p66
    %p69 = scmp.ne.s32.totalorder %s52, %s68
    %p70 = scmp.eq.s32.totalorder %s18, 0
    %p71 = por %p69, %p70
    %s73 = sadd.s32 %s72, 1
    %p76 = scmp.eq.s32.totalorder %s12, 1
    %p77 = scmp.ne.s32.totalorder %s72, %s74
    %p78 = scmp.eq.s32.totalorder %s12, 0
    %p79 = por %p77, %p78
    %p80 = scmp.ne.s32.totalorder %s72, %s74
    %p81 = scmp.eq.s32.totalorder %s17, 1
    %p82 = por %p80, %p81
    %p83 = scmp.ne.s32.totalorder %s74, %s75
    %p84 = scmp.eq.s32.totalorder %s17, 0
    %p85 = por %p83, %p84
    %p86 = scmp.ne.s32.totalorder %s74, %s75
    %p87 = scmp.eq.s32.totalorder %s18, 1
    %p88 = por %p86, %p87
    %p90 = scmp.ne.s32.totalorder %s75, %s89
    %p91 = scmp.eq.s32.totalorder %s18, 0
    %p92 = por %p90, %p91
    %s94 = sadd.s32 %s93, 1
    %p97 = scmp.eq.s32.totalorder %s12, 1
    %p98 = scmp.ne.s32.totalorder %s93, %s95
    %p99 = scmp.eq.s32.totalorder %s12, 0
    %p100 = por %p98, %p99
    %p101 = scmp.ne.s32.totalorder %s93, %s95
    %p102 = scmp.eq.s32.totalorder %s17, 1
    %p103 = por %p101, %p102
    %p104 = scmp.ne.s32.totalorder %s95, %s96
    %p105 = scmp.eq.s32.totalorder %s17, 0
    %p106 = por %p104, %p105
    %p107 = scmp.ne.s32.totalorder %s95, %s96
    %p108 = scmp.eq.s32.totalorder %s18, 1
    %p109 = por %p107, %p108
    %p111 = scmp.ne.s32.totalorder %s96, %s110
    %p112 = scmp.eq.s32.totalorder %s18, 0
    %p113 = por %p111, %p112
    %s115 = sadd.s32 %s114, 1
    %p118 = scmp.eq.s32.totalorder %s12, 1
    %p119 = scmp.ne.s32.totalorder %s114, %s116
    %p120 = scmp.eq.s32.totalorder %s12, 0
    %p121 = por %p119, %p120
    %p122 = scmp.ne.s32.totalorder %s114, %s116
    %p123 = scmp.eq.s32.totalorder %s17, 1
    %p124 = por %p122, %p123
    %p125 = scmp.ne.s32.totalorder %s116, %s117
    %p126 = scmp.eq.s32.totalorder %s17, 0
    %p127 = por %p125, %p126
    %p128 = scmp.ne.s32.totalorder %s116, %s117
    %p129 = scmp.eq.s32.totalorder %s18, 1
    %p130 = por %p128, %p129
    %p132 = scmp.ne.s32.totalorder %s117, %s131
    %p133 = scmp.eq.s32.totalorder %s18, 0
    %p134 = por %p132, %p133
    %s136 = sadd.s32 %s135, 1
    %p139 = scmp.eq.s32.totalorder %s12, 1
    %p140 = scmp.ne.s32.totalorder %s135, %s137
    %p141 = scmp.eq.s32.totalorder %s12, 0
    %p142 = por %p140, %p141
    %p143 = scmp.ne.s32.totalorder %s135, %s137
    %p144 = scmp.eq.s32.totalorder %s17, 1
    %p145 = por %p143, %p144
    %p146 = scmp.ne.s32.totalorder %s137, %s138
    %p147 = scmp.eq.s32.totalorder %s17, 0
    %p148 = por %p146, %p147
    %p149 = scmp.ne.s32.totalorder %s137, %s138
    %p150 = scmp.eq.s32.totalorder %s18, 1
    %p151 = por %p149, %p150
    %p153 = scmp.ne.s32.totalorder %s138, %s152
    %p154 = scmp.eq.s32.totalorder %s18, 0
    %p155 = por %p153, %p154
    %s156 = ssub.s32 %s12, %s19
    %p157 = scmp.eq.s32.totalorder %s156, 0
    %s159 = sadd.s32 %s158, 1
    %s160 = scalar_select %p157, %s158, %s159
    %p163 = pneg %p157
    %p164 = scmp.eq.s32.totalorder %s12, 1
    %p165 = por %p163, %p164
    %p166 = scmp.ne.s32.totalorder %s158, %s161
    %p167 = scmp.eq.s32.totalorder %s12, 0
    %p168 = por %p166, %p167
    %p169 = scmp.ne.s32.totalorder %s158, %s161
    %p170 = scmp.eq.s32.totalorder %s17, 1
    %p171 = por %p169, %p170
    %p172 = scmp.ne.s32.totalorder %s161, %s162
    %p173 = scmp.eq.s32.totalorder %s17, 0
    %p174 = por %p172, %p173
    %p175 = scmp.ne.s32.totalorder %s161, %s162
    %p176 = scmp.eq.s32.totalorder %s18, 1
    %p177 = por %p175, %p176
    %p179 = scmp.ne.s32.totalorder %s162, %s178
    %p180 = scmp.eq.s32.totalorder %s18, 0
    %p181 = por %p179, %p180
    %p182 = scmp.le.s32.totalorder 1, %s12
    %p183 = scmp.lt.s32.totalorder %s12, 3
    %p184 = pnand %p182, %p183
    %p185 = pneg %p184
    // Predicated region
    $region9: #{basic_block.1} parent=5 // pred_check
      _
    $region10: #{basic_block.1} parent=5 // pred_check_branch
      %187 = sbr.rel (%p184) target = $region12
    $region11: #{basic_block.1} parent=5 // pred_region
      %s188 = ssub.s32 %s12, 1
      // Predicated region
      $region13: #{basic_block.1} parent=11 // pred_check
        %p189 = pneg %p85
      $region14: #{basic_block.1} parent=11 // pred_check_branch
        %191 = sbr.rel (%p189) target = $region16
      $region15: #{basic_block.1} parent=11 // pred_region
        _
      $region16: #{basic_block.1} parent=11 // pred_fallthru
        _
      // Predicated region
      $region17: #{basic_block.1} parent=11 // pred_check
        %p192 = pneg %p106
      $region18: #{basic_block.1} parent=11 // pred_check_branch
        %194 = sbr.rel (%p192) target = $region20
      $region19: #{basic_block.1} parent=11 // pred_region
        _
      $region20: #{basic_block.1} parent=11 // pred_fallthru
        _
      // Predicated region
      $region21: #{basic_block.1} parent=11 // pred_check
        %p195 = pneg %p127
      $region22: #{basic_block.1} parent=11 // pred_check_branch
        %197 = sbr.rel (%p195) target = $region24
      $region23: #{basic_block.1} parent=11 // pred_region
        _
      $region24: #{basic_block.1} parent=11 // pred_fallthru
        _
      // Predicated region
      $region25: #{basic_block.1} parent=11 // pred_check
        %p198 = pneg %p148
      $region26: #{basic_block.1} parent=11 // pred_check_branch
        %200 = sbr.rel (%p198) target = $region28
      $region27: #{basic_block.1} parent=11 // pred_region
        _
      $region28: #{basic_block.1} parent=11 // pred_fallthru
        _
    $region12: #{basic_block.1} parent=5 // pred_fallthru
      _
    %p201 = scmp.lt.s32.totalorder %s12, 2
    // Predicated region
    $region29: #{basic_block.1} parent=5 // pred_check
      %p202 = pneg %p201
    $region30: #{basic_block.1} parent=5 // pred_check_branch
      %204 = sbr.rel (%p202) target = $region32
    $region31: #{basic_block.1} parent=5 // pred_region
      // Predicated region
      $region33: #{basic_block.1} parent=31 // pred_check
        %p205 = pneg %p32
      $region34: #{basic_block.1} parent=31 // pred_check_branch
        %207 = sbr.rel (%p205) target = $region36
      $region35: #{basic_block.1} parent=31 // pred_region
        %p208 = scmp.lt.s32.totalorder %s12, 1
        %s209 = scalar_select %p208, %s12, 1
        %s210 = smul.addr %s209, 54
        %s211 = smul.addr %s210, 8
        %s212 = scalar_lea.vmem %s0, %s211
      $region36: #{basic_block.1} parent=31 // pred_fallthru
        _
      // Predicated region
      $region37: #{basic_block.1} parent=31 // pred_check
        %p213 = pneg %p58
      $region38: #{basic_block.1} parent=31 // pred_check_branch
        %215 = sbr.rel (%p213) target = $region40
      $region39: #{basic_block.1} parent=31 // pred_region
        %p216 = scmp.lt.s32.totalorder %s12, 1
        %s217 = scalar_select %p216, %s12, 1
        %s218 = smul.addr %s217, 32
        %s219 = smul.addr %s218, 8
        %s220 = scalar_lea.vmem %s1, %s219
      $region40: #{basic_block.1} parent=31 // pred_fallthru
        _
    $region32: #{basic_block.1} parent=5 // pred_fallthru
      _
    %p221 = scmp.le.s32.totalorder 1, %s12
    %p222 = scmp.lt.s32.totalorder %s12, 3
    %p223 = pnand %p221, %p222
    %p224 = pneg %p223
    // Predicated region
    $region41: #{basic_block.1} parent=5 // pred_check
      _
    $region42: #{basic_block.1} parent=5 // pred_check_branch
      %226 = sbr.rel (%p223) target = $region44
    $region43: #{basic_block.1} parent=5 // pred_region
      %s227 = ssub.s32 %s12, 1
      %p228 = scmp.lt.s32.totalorder %s17, 1
      %s229 = scalar_select %p228, %s17, 1
      %s230 = smul.addr %s229, 54
      %s231 = smul.addr %s230, 8
      %s232 = scalar_lea.vmem %s0, %s231
      %p233 = pneg %p38
      %p234 = pneg %p35
      %p235 = scmp.lt.s32.totalorder %s17, 1
      %s236 = scalar_select %p235, %s17, 1
      %s237 = smul.addr %s236, 32
      %s238 = smul.addr %s237, 8
      %s239 = scalar_lea.vmem %s1, %s238
      %p240 = pneg %p64
      %p241 = pneg %p61
      %p242 = pneg %p85
      %p243 = pneg %p82
      %p244 = pneg %p106
      %p245 = pneg %p103
      %p246 = pneg %p127
      %p247 = pneg %p124
      %p248 = pneg %p148
      %p249 = pneg %p145
      %p250 = pneg %p174
      %p251 = pneg %p171
      %p252 = scmp.lt.s32.totalorder %s17, 1
      %s253 = scalar_select %p252, %s17, 1
      %s254 = smul.addr %s253, 32
      %s255 = smul.addr %s254, 8
      %s256 = scalar_lea.vmem %s6, %s255
      %p257 = scmp.lt.s32.totalorder %s17, 1
      %s258 = scalar_select %p257, %s17, 1
      %s259 = smul.addr %s258, 54
      %s260 = smul.addr %s259, 8
      %s261 = scalar_lea.vmem %s0, %s260
      %p262 = scmp.lt.s32.totalorder %s17, 1
      %s263 = scalar_select %p262, %s17, 1
      %s264 = smul.addr %s263, 32
      %s265 = smul.addr %s264, 8
      %s266 = scalar_lea.vmem %s1, %s265
      %p267 = scmp.lt.s32.totalorder %s17, 1
      %s268 = scalar_select %p267, %s17, 1
      %s269 = smul.addr %s268, 32
      %s270 = smul.addr %s269, 8
      %s271 = scalar_lea.vmem %s6, %s270
      %vm272 = vcmask 64512
      %273 = vst.msk [vmem:[#allocation2] sm:$0xff] %vm272, 0.0
      %274 = vst.msk [vmem:[#allocation2 + $0x8] sm:$0xff] %vm272, 0.0
      %vm275 = vcmask 58368
      %276 = vst.msk [vmem:[#allocation2 + $0x10] sm:$0x3] %vm275, 0.0
      %s277 = scalar_lea.vmem [#allocation2], 408
      %278 = vst.msk [vmem:[%s277] sm:$0xff] %vm272, 0.0
      %279 = vst.msk [vmem:[%s277 + $0x8] sm:$0xff] %vm272, 0.0
      %280 = vst.msk [vmem:[%s277 + $0x10] sm:$0x3] %vm275, 0.0
      %vm281 = vcmask 57344
      %282 = vst.msk [vmem:[#allocation2] sm:$0x1] %vm281, 0.0
      %283 = vst.msk [vmem:[#allocation2 + $0x18] sm:$0x1] %vm281, 0.0
      %284 = vst.msk [vmem:[#allocation2 + $0x30] sm:$0x1] %vm281, 0.0
      %285 = vst.msk [vmem:[#allocation2 + $0x48] sm:$0x1] %vm281, 0.0
      %286 = vst.msk [vmem:[#allocation2 + $0x60] sm:$0x1] %vm281, 0.0
      %287 = vst.msk [vmem:[#allocation2 + $0x78] sm:$0x1] %vm281, 0.0
      %288 = vst.msk [vmem:[#allocation2 + $0x90] sm:$0x1] %vm281, 0.0
      %289 = vst.msk [vmem:[#allocation2 + $0xa8] sm:$0x1] %vm281, 0.0
      %290 = vst.msk [vmem:[#allocation2 + $0xc0] sm:$0x1] %vm281, 0.0
      %291 = vst.msk [vmem:[#allocation2 + $0xd8] sm:$0x1] %vm281, 0.0
      %292 = vst.msk [vmem:[#allocation2 + $0xf0] sm:$0x1] %vm281, 0.0
      %293 = vst.msk [vmem:[#allocation2 + $0x108] sm:$0x1] %vm281, 0.0
      %294 = vst.msk [vmem:[#allocation2 + $0x120] sm:$0x1] %vm281, 0.0
      %295 = vst.msk [vmem:[#allocation2 + $0x138] sm:$0x1] %vm281, 0.0
      %296 = vst.msk [vmem:[#allocation2 + $0x150] sm:$0x1] %vm281, 0.0
      %297 = vst.msk [vmem:[#allocation2 + $0x168] sm:$0x1] %vm281, 0.0
      %298 = vst.msk [vmem:[#allocation2 + $0x180] sm:$0x1] %vm281, 0.0
      %299 = vst.msk [vmem:[#allocation2 + $0x198] sm:$0x1] %vm281, 0.0
      %300 = vst.msk [vmem:[#allocation2 + $0x11] sm:$0x1] %vm281, 0.0
      %301 = vst.msk [vmem:[#allocation2 + $0x29] sm:$0x1] %vm281, 0.0
      %302 = vst.msk [vmem:[#allocation2 + $0x41] sm:$0x1] %vm281, 0.0
      %303 = vst.msk [vmem:[#allocation2 + $0x59] sm:$0x1] %vm281, 0.0
      %304 = vst.msk [vmem:[#allocation2 + $0x71] sm:$0x1] %vm281, 0.0
      %305 = vst.msk [vmem:[#allocation2 + $0x89] sm:$0x1] %vm281, 0.0
      %306 = vst.msk [vmem:[#allocation2 + $0xa1] sm:$0x1] %vm281, 0.0
      %307 = vst.msk [vmem:[#allocation2 + $0xb9] sm:$0x1] %vm281, 0.0
      %308 = vst.msk [vmem:[#allocation2 + $0xd1] sm:$0x1] %vm281, 0.0
      %309 = vst.msk [vmem:[#allocation2 + $0xe9] sm:$0x1] %vm281, 0.0
      %310 = vst.msk [vmem:[#allocation2 + $0x101] sm:$0x1] %vm281, 0.0
      %311 = vst.msk [vmem:[#allocation2 + $0x119] sm:$0x1] %vm281, 0.0
      %312 = vst.msk [vmem:[#allocation2 + $0x131] sm:$0x1] %vm281, 0.0
      %313 = vst.msk [vmem:[#allocation2 + $0x149] sm:$0x1] %vm281, 0.0
      %314 = vst.msk [vmem:[#allocation2 + $0x161] sm:$0x1] %vm281, 0.0
      %315 = vst.msk [vmem:[#allocation2 + $0x179] sm:$0x1] %vm281, 0.0
      %316 = vst.msk [vmem:[#allocation2 + $0x191] sm:$0x1] %vm281, 0.0
      %317 = vst.msk [vmem:[#allocation2 + $0x1a9] sm:$0x1] %vm281, 0.0
      %v318 = vld [vmem:[%s2] sm:$0xff]
      %v319 = vld [vmem:[%s2 + $0x8] sm:$0xff]
      %v320 = vld [vmem:[%s2 + $0x10] sm:$0xff]
      %v321 = vld [vmem:[%s2 + $0x18] sm:$0xff]
      %v322 = vld [vmem:[%s2 + $0x20] sm:$0xff]
      %v323 = vld [vmem:[%s2 + $0x28] sm:$0xff]
      %v324 = vld [vmem:[%s2 + $0x30] sm:$0xff]
      %v325 = vld [vmem:[%s2 + $0x38] sm:$0xff]
      %v326 = vld [vmem:[%s2 + $0x40] sm:$0xff]
      %v327 = vld [vmem:[%s3] sm:$0x1]
      %v328 = vld [vmem:[%s4] sm:$0xff]
      %v329 = vld [vmem:[%s4 + $0x8] sm:$0xff]
      %v330 = vld [vmem:[%s4 + $0x10] sm:$0xff]
      %v331 = vld [vmem:[%s4 + $0x18] sm:$0xff]
      %v332 = vld [vmem:[%s4 + $0x20] sm:$0xff]
      %v333 = vld [vmem:[%s4 + $0x28] sm:$0xff]
      %v334 = vld [vmem:[%s4 + $0x30] sm:$0xff]
      %v335 = vld [vmem:[%s4 + $0x38] sm:$0xff]
      %v336 = vld [vmem:[%s4 + $0x40] sm:$0xff]
      %v337 = vld [vmem:[%s5] sm:$0x1]
      loop: start=0, step=1, limit=2
      $region45: #{basic_block.1} parent=43 // loop_pre_header
        _
      $region46: #{basic_block.1} parent=43 // loop_header
        %s339 = sphi 0, %s343
        %p340 = scmp.ge.s32.totalorder %s339, 2
      $region47: #{basic_block.1} parent=43 // loop_header_branch
        %342 = sbr.rel (%p340) target = $region51
      $region48: #{basic_block.1} parent=43 // loop_body
        %s344 = smul.u32 %s339, 8
        %s345 = smul.u32 %s344, 24
        %s346 = scalar_lea.vmem %s261, %s345
        %v347 = vld [vmem:[%s346] sm:$0xff]
        %v348 = vld [vmem:[%s346 + $0x8] sm:$0xff]
        %v349 = vld [vmem:[%s346 + $0x10] sm:$0x3]
        %v350 = vld [vmem:[%s346 + $0x18] sm:$0xff]
        %v351 = vld [vmem:[%s346 + $0x20] sm:$0xff]
        %v352 = vld [vmem:[%s346 + $0x28] sm:$0x3]
        %v353 = vld [vmem:[%s346 + $0x30] sm:$0xff]
        %v354 = vld [vmem:[%s346 + $0x38] sm:$0xff]
        %v355 = vld [vmem:[%s346 + $0x40] sm:$0x3]
        %v356 = vld [vmem:[%s346 + $0x48] sm:$0xff]
        %v357 = vld [vmem:[%s346 + $0x50] sm:$0xff]
        %v358 = vld [vmem:[%s346 + $0x58] sm:$0x3]
        %v359 = vld [vmem:[%s346 + $0x60] sm:$0xff]
        %v360 = vld [vmem:[%s346 + $0x68] sm:$0xff]
        %v361 = vld [vmem:[%s346 + $0x70] sm:$0x3]
        %v362 = vld [vmem:[%s346 + $0x78] sm:$0xff]
        %v363 = vld [vmem:[%s346 + $0x80] sm:$0xff]
        %v364 = vld [vmem:[%s346 + $0x88] sm:$0x3]
        %v365 = vld [vmem:[%s346 + $0x90] sm:$0xff]
        %v366 = vld [vmem:[%s346 + $0x98] sm:$0xff]
        %v367 = vld [vmem:[%s346 + $0xa0] sm:$0x3]
        %v368 = vld [vmem:[%s346 + $0xa8] sm:$0xff]
        %v369 = vld [vmem:[%s346 + $0xb0] sm:$0xff]
        %v370 = vld [vmem:[%s346 + $0xb8] sm:$0x3]
        %v371 = vld [vmem:[%s346 + $0xc0] sm:$0xff]
        %v372 = vld [vmem:[%s346 + $0xc8] sm:$0xff]
        %v373 = vld [vmem:[%s346 + $0xd0] sm:$0x3]
        %v374 = vld [vmem:[%s346 + $0xd8] sm:$0xff]
        %v375 = vld [vmem:[%s346 + $0xe0] sm:$0xff]
        %v376 = vld [vmem:[%s346 + $0xe8] sm:$0x3]
        %vm401 = vcmask 1046528
        %v402 = vrot.slane %v347, 1
        %v403 = vrot.slane %v348, 1
        %v404 = vsel %vm401, %v402, %v403
        %v405 = vrot.slane %v349, 1
        %v406 = vsel %vm401, %v403, %v405
        %v407 = vrot.slane %v350, 1
        %v408 = vrot.slane %v351, 1
        %v409 = vsel %vm401, %v407, %v408
        %v410 = vrot.slane %v352, 1
        %v411 = vsel %vm401, %v408, %v410
        %v412 = vrot.slane %v353, 1
        %v413 = vrot.slane %v354, 1
        %v414 = vsel %vm401, %v412, %v413
        %v415 = vrot.slane %v355, 1
        %v416 = vsel %vm401, %v413, %v415
        %v417 = vrot.slane %v356, 1
        %v418 = vrot.slane %v357, 1
        %v419 = vsel %vm401, %v417, %v418
        %v420 = vrot.slane %v358, 1
        %v421 = vsel %vm401, %v418, %v420
        %v422 = vrot.slane %v359, 1
        %v423 = vrot.slane %v360, 1
        %v424 = vsel %vm401, %v422, %v423
        %v425 = vrot.slane %v361, 1
        %v426 = vsel %vm401, %v423, %v425
        %v427 = vrot.slane %v362, 1
        %v428 = vrot.slane %v363, 1
        %v429 = vsel %vm401, %v427, %v428
        %v430 = vrot.slane %v364, 1
        %v431 = vsel %vm401, %v428, %v430
        %v432 = vrot.slane %v365, 1
        %v433 = vrot.slane %v366, 1
        %v434 = vsel %vm401, %v432, %v433
        %v435 = vrot.slane %v367, 1
        %v436 = vsel %vm401, %v433, %v435
        %v437 = vrot.slane %v368, 1
        %v438 = vrot.slane %v369, 1
        %v439 = vsel %vm401, %v437, %v438
        %v440 = vrot.slane %v370, 1
        %v441 = vsel %vm401, %v438, %v440
        %442 = vrot.lane.b32.xlu0 %v404, 8
        %v443 = vpop.permute.xlu0 %442
        %444 = vrot.lane.b32.xlu0 %v406, 8
        %v445 = vpop.permute.xlu0 %444
        %446 = vrot.lane.b32.xlu0 %v409, 8
        %v447 = vpop.permute.xlu0 %446
        %448 = vrot.lane.b32.xlu0 %v411, 8
        %v449 = vpop.permute.xlu0 %448
        %450 = vrot.lane.b32.xlu0 %v414, 8
        %v451 = vpop.permute.xlu0 %450
        %452 = vrot.lane.b32.xlu0 %v416, 8
        %v453 = vpop.permute.xlu0 %452
        %454 = vrot.lane.b32.xlu0 %v419, 8
        %v455 = vpop.permute.xlu0 %454
        %456 = vrot.lane.b32.xlu0 %v421, 8
        %v457 = vpop.permute.xlu0 %456
        %458 = vrot.lane.b32.xlu0 %v424, 8
        %v459 = vpop.permute.xlu0 %458
        %460 = vrot.lane.b32.xlu0 %v426, 8
        %v461 = vpop.permute.xlu0 %460
        %462 = vrot.lane.b32.xlu0 %v429, 8
        %v463 = vpop.permute.xlu0 %462
        %464 = vrot.lane.b32.xlu0 %v431, 8
        %v465 = vpop.permute.xlu0 %464
        %466 = vrot.lane.b32.xlu0 %v434, 8
        %v467 = vpop.permute.xlu0 %466
        %468 = vrot.lane.b32.xlu0 %v436, 8
        %v469 = vpop.permute.xlu0 %468
        %470 = vrot.lane.b32.xlu0 %v439, 8
        %v471 = vpop.permute.xlu0 %470
        %472 = vrot.lane.b32.xlu0 %v441, 8
        %v473 = vpop.permute.xlu0 %472
        %vm490 = vcmask 1045504
        %v491 = vrot.slane %v347, 2
        %v492 = vrot.slane %v348, 2
        %v493 = vsel %vm490, %v491, %v492
        %v494 = vrot.slane %v349, 2
        %v495 = vsel %vm490, %v492, %v494
        %v496 = vrot.slane %v350, 2
        %v497 = vrot.slane %v351, 2
        %v498 = vsel %vm490, %v496, %v497
        %v499 = vrot.slane %v352, 2
        %v500 = vsel %vm490, %v497, %v499
        %v501 = vrot.slane %v353, 2
        %v502 = vrot.slane %v354, 2
        %v503 = vsel %vm490, %v501, %v502
        %v504 = vrot.slane %v355, 2
        %v505 = vsel %vm490, %v502, %v504
        %v506 = vrot.slane %v356, 2
        %v507 = vrot.slane %v357, 2
        %v508 = vsel %vm490, %v506, %v507
        %v509 = vrot.slane %v358, 2
        %v510 = vsel %vm490, %v507, %v509
        %v511 = vrot.slane %v359, 2
        %v512 = vrot.slane %v360, 2
        %v513 = vsel %vm490, %v511, %v512
        %v514 = vrot.slane %v361, 2
        %v515 = vsel %vm490, %v512, %v514
        %v516 = vrot.slane %v362, 2
        %v517 = vrot.slane %v363, 2
        %v518 = vsel %vm490, %v516, %v517
        %v519 = vrot.slane %v364, 2
        %v520 = vsel %vm490, %v517, %v519
        %v521 = vrot.slane %v365, 2
        %v522 = vrot.slane %v366, 2
        %v523 = vsel %vm490, %v521, %v522
        %v524 = vrot.slane %v367, 2
        %v525 = vsel %vm490, %v522, %v524
        %v526 = vrot.slane %v368, 2
        %v527 = vrot.slane %v369, 2
        %v528 = vsel %vm490, %v526, %v527
        %v529 = vrot.slane %v370, 2
        %v530 = vsel %vm490, %v527, %v529
        %531 = vrot.lane.b32.xlu0 %v493, 16
        %v532 = vpop.permute.xlu0 %531
        %533 = vrot.lane.b32.xlu0 %v495, 16
        %v534 = vpop.permute.xlu0 %533
        %535 = vrot.lane.b32.xlu0 %v498, 16
        %v536 = vpop.permute.xlu0 %535
        %537 = vrot.lane.b32.xlu0 %v500, 16
        %v538 = vpop.permute.xlu0 %537
        %539 = vrot.lane.b32.xlu0 %v503, 16
        %v540 = vpop.permute.xlu0 %539
        %541 = vrot.lane.b32.xlu0 %v505, 16
        %v542 = vpop.permute.xlu0 %541
        %543 = vrot.lane.b32.xlu0 %v508, 16
        %v544 = vpop.permute.xlu0 %543
        %545 = vrot.lane.b32.xlu0 %v510, 16
        %v546 = vpop.permute.xlu0 %545
        %547 = vrot.lane.b32.xlu0 %v513, 16
        %v548 = vpop.permute.xlu0 %547
        %549 = vrot.lane.b32.xlu0 %v515, 16
        %v550 = vpop.permute.xlu0 %549
        %551 = vrot.lane.b32.xlu0 %v518, 16
        %v552 = vpop.permute.xlu0 %551
        %553 = vrot.lane.b32.xlu0 %v520, 16
        %v554 = vpop.permute.xlu0 %553
        %555 = vrot.lane.b32.xlu0 %v523, 16
        %v556 = vpop.permute.xlu0 %555
        %557 = vrot.lane.b32.xlu0 %v525, 16
        %v558 = vpop.permute.xlu0 %557
        %559 = vrot.lane.b32.xlu0 %v528, 16
        %v560 = vpop.permute.xlu0 %559
        %561 = vrot.lane.b32.xlu0 %v530, 16
        %v562 = vpop.permute.xlu0 %561
        %581 = vrot.lane.b32.xlu0 %v350, 24
        %v582 = vpop.permute.xlu0 %581
        %583 = vrot.lane.b32.xlu0 %v351, 24
        %v584 = vpop.permute.xlu0 %583
        %585 = vrot.lane.b32.xlu0 %v353, 24
        %v586 = vpop.permute.xlu0 %585
        %587 = vrot.lane.b32.xlu0 %v354, 24
        %v588 = vpop.permute.xlu0 %587
        %589 = vrot.lane.b32.xlu0 %v356, 24
        %v590 = vpop.permute.xlu0 %589
        %591 = vrot.lane.b32.xlu0 %v357, 24
        %v592 = vpop.permute.xlu0 %591
        %593 = vrot.lane.b32.xlu0 %v359, 24
        %v594 = vpop.permute.xlu0 %593
        %595 = vrot.lane.b32.xlu0 %v360, 24
        %v596 = vpop.permute.xlu0 %595
        %597 = vrot.lane.b32.xlu0 %v362, 24
        %v598 = vpop.permute.xlu0 %597
        %599 = vrot.lane.b32.xlu0 %v363, 24
        %v600 = vpop.permute.xlu0 %599
        %601 = vrot.lane.b32.xlu0 %v365, 24
        %v602 = vpop.permute.xlu0 %601
        %603 = vrot.lane.b32.xlu0 %v366, 24
        %v604 = vpop.permute.xlu0 %603
        %605 = vrot.lane.b32.xlu0 %v368, 24
        %v606 = vpop.permute.xlu0 %605
        %607 = vrot.lane.b32.xlu0 %v369, 24
        %v608 = vpop.permute.xlu0 %607
        %609 = vrot.lane.b32.xlu0 %v371, 24
        %v610 = vpop.permute.xlu0 %609
        %611 = vrot.lane.b32.xlu0 %v372, 24
        %v612 = vpop.permute.xlu0 %611
        %v630 = vrot.slane %v371, 1
        %v631 = vrot.slane %v372, 1
        %v632 = vsel %vm401, %v630, %v631
        %v633 = vrot.slane %v373, 1
        %v634 = vsel %vm401, %v631, %v633
        %635 = vrot.lane.b32.xlu0 %v409, 32
        %v636 = vpop.permute.xlu0 %635
        %637 = vrot.lane.b32.xlu0 %v411, 32
        %v638 = vpop.permute.xlu0 %637
        %639 = vrot.lane.b32.xlu0 %v414, 32
        %v640 = vpop.permute.xlu0 %639
        %641 = vrot.lane.b32.xlu0 %v416, 32
        %v642 = vpop.permute.xlu0 %641
        %643 = vrot.lane.b32.xlu0 %v419, 32
        %v644 = vpop.permute.xlu0 %643
        %645 = vrot.lane.b32.xlu0 %v421, 32
        %v646 = vpop.permute.xlu0 %645
        %647 = vrot.lane.b32.xlu0 %v424, 32
        %v648 = vpop.permute.xlu0 %647
        %649 = vrot.lane.b32.xlu0 %v426, 32
        %v650 = vpop.permute.xlu0 %649
        %651 = vrot.lane.b32.xlu0 %v429, 32
        %v652 = vpop.permute.xlu0 %651
        %653 = vrot.lane.b32.xlu0 %v431, 32
        %v654 = vpop.permute.xlu0 %653
        %655 = vrot.lane.b32.xlu0 %v434, 32
        %v656 = vpop.permute.xlu0 %655
        %657 = vrot.lane.b32.xlu0 %v436, 32
        %v658 = vpop.permute.xlu0 %657
        %659 = vrot.lane.b32.xlu0 %v439, 32
        %v660 = vpop.permute.xlu0 %659
        %661 = vrot.lane.b32.xlu0 %v441, 32
        %v662 = vpop.permute.xlu0 %661
        %663 = vrot.lane.b32.xlu0 %v632, 32
        %v664 = vpop.permute.xlu0 %663
        %665 = vrot.lane.b32.xlu0 %v634, 32
        %v666 = vpop.permute.xlu0 %665
        %v683 = vrot.slane %v371, 2
        %v684 = vrot.slane %v372, 2
        %v685 = vsel %vm490, %v683, %v684
        %v686 = vrot.slane %v373, 2
        %v687 = vsel %vm490, %v684, %v686
        %688 = vrot.lane.b32.xlu0 %v498, 40
        %v689 = vpop.permute.xlu0 %688
        %690 = vrot.lane.b32.xlu0 %v500, 40
        %v691 = vpop.permute.xlu0 %690
        %692 = vrot.lane.b32.xlu0 %v503, 40
        %v693 = vpop.permute.xlu0 %692
        %694 = vrot.lane.b32.xlu0 %v505, 40
        %v695 = vpop.permute.xlu0 %694
        %696 = vrot.lane.b32.xlu0 %v508, 40
        %v697 = vpop.permute.xlu0 %696
        %698 = vrot.lane.b32.xlu0 %v510, 40
        %v699 = vpop.permute.xlu0 %698
        %700 = vrot.lane.b32.xlu0 %v513, 40
        %v701 = vpop.permute.xlu0 %700
        %702 = vrot.lane.b32.xlu0 %v515, 40
        %v703 = vpop.permute.xlu0 %702
        %704 = vrot.lane.b32.xlu0 %v518, 40
        %v705 = vpop.permute.xlu0 %704
        %706 = vrot.lane.b32.xlu0 %v520, 40
        %v707 = vpop.permute.xlu0 %706
        %708 = vrot.lane.b32.xlu0 %v523, 40
        %v709 = vpop.permute.xlu0 %708
        %710 = vrot.lane.b32.xlu0 %v525, 40
        %v711 = vpop.permute.xlu0 %710
        %712 = vrot.lane.b32.xlu0 %v528, 40
        %v713 = vpop.permute.xlu0 %712
        %714 = vrot.lane.b32.xlu0 %v530, 40
        %v715 = vpop.permute.xlu0 %714
        %716 = vrot.lane.b32.xlu0 %v685, 40
        %v717 = vpop.permute.xlu0 %716
        %718 = vrot.lane.b32.xlu0 %v687, 40
        %v719 = vpop.permute.xlu0 %718
        %738 = vrot.lane.b32.xlu0 %v353, 48
        %v739 = vpop.permute.xlu0 %738
        %740 = vrot.lane.b32.xlu0 %v354, 48
        %v741 = vpop.permute.xlu0 %740
        %742 = vrot.lane.b32.xlu0 %v356, 48
        %v743 = vpop.permute.xlu0 %742
        %744 = vrot.lane.b32.xlu0 %v357, 48
        %v745 = vpop.permute.xlu0 %744
        %746 = vrot.lane.b32.xlu0 %v359, 48
        %v747 = vpop.permute.xlu0 %746
        %748 = vrot.lane.b32.xlu0 %v360, 48
        %v749 = vpop.permute.xlu0 %748
        %750 = vrot.lane.b32.xlu0 %v362, 48
        %v751 = vpop.permute.xlu0 %750
        %752 = vrot.lane.b32.xlu0 %v363, 48
        %v753 = vpop.permute.xlu0 %752
        %754 = vrot.lane.b32.xlu0 %v365, 48
        %v755 = vpop.permute.xlu0 %754
        %756 = vrot.lane.b32.xlu0 %v366, 48
        %v757 = vpop.permute.xlu0 %756
        %758 = vrot.lane.b32.xlu0 %v368, 48
        %v759 = vpop.permute.xlu0 %758
        %760 = vrot.lane.b32.xlu0 %v369, 48
        %v761 = vpop.permute.xlu0 %760
        %762 = vrot.lane.b32.xlu0 %v371, 48
        %v763 = vpop.permute.xlu0 %762
        %764 = vrot.lane.b32.xlu0 %v372, 48
        %v765 = vpop.permute.xlu0 %764
        %766 = vrot.lane.b32.xlu0 %v374, 48
        %v767 = vpop.permute.xlu0 %766
        %768 = vrot.lane.b32.xlu0 %v375, 48
        %v769 = vpop.permute.xlu0 %768
        %v787 = vrot.slane %v374, 1
        %v788 = vrot.slane %v375, 1
        %v789 = vsel %vm401, %v787, %v788
        %v790 = vrot.slane %v376, 1
        %v791 = vsel %vm401, %v788, %v790
        %792 = vrot.lane.b32.xlu0 %v414, 56
        %v793 = vpop.permute.xlu0 %792
        %794 = vrot.lane.b32.xlu0 %v416, 56
        %v795 = vpop.permute.xlu0 %794
        %796 = vrot.lane.b32.xlu0 %v419, 56
        %v797 = vpop.permute.xlu0 %796
        %798 = vrot.lane.b32.xlu0 %v421, 56
        %v799 = vpop.permute.xlu0 %798
        %800 = vrot.lane.b32.xlu0 %v424, 56
        %v801 = vpop.permute.xlu0 %800
        %802 = vrot.lane.b32.xlu0 %v426, 56
        %v803 = vpop.permute.xlu0 %802
        %804 = vrot.lane.b32.xlu0 %v429, 56
        %v805 = vpop.permute.xlu0 %804
        %806 = vrot.lane.b32.xlu0 %v431, 56
        %v807 = vpop.permute.xlu0 %806
        %808 = vrot.lane.b32.xlu0 %v434, 56
        %v809 = vpop.permute.xlu0 %808
        %810 = vrot.lane.b32.xlu0 %v436, 56
        %v811 = vpop.permute.xlu0 %810
        %812 = vrot.lane.b32.xlu0 %v439, 56
        %v813 = vpop.permute.xlu0 %812
        %814 = vrot.lane.b32.xlu0 %v441, 56
        %v815 = vpop.permute.xlu0 %814
        %816 = vrot.lane.b32.xlu0 %v632, 56
        %v817 = vpop.permute.xlu0 %816
        %818 = vrot.lane.b32.xlu0 %v634, 56
        %v819 = vpop.permute.xlu0 %818
        %820 = vrot.lane.b32.xlu0 %v789, 56
        %v821 = vpop.permute.xlu0 %820
        %822 = vrot.lane.b32.xlu0 %v791, 56
        %v823 = vpop.permute.xlu0 %822
        %v840 = vrot.slane %v374, 2
        %v841 = vrot.slane %v375, 2
        %v842 = vsel %vm490, %v840, %v841
        %v843 = vrot.slane %v376, 2
        %v844 = vsel %vm490, %v841, %v843
        %845 = vrot.lane.b32.xlu0 %v503, 64
        %v846 = vpop.permute.xlu0 %845
        %847 = vrot.lane.b32.xlu0 %v505, 64
        %v848 = vpop.permute.xlu0 %847
        %849 = vrot.lane.b32.xlu0 %v508, 64
        %v850 = vpop.permute.xlu0 %849
        %851 = vrot.lane.b32.xlu0 %v510, 64
        %v852 = vpop.permute.xlu0 %851
        %853 = vrot.lane.b32.xlu0 %v513, 64
        %v854 = vpop.permute.xlu0 %853
        %855 = vrot.lane.b32.xlu0 %v515, 64
        %v856 = vpop.permute.xlu0 %855
        %857 = vrot.lane.b32.xlu0 %v518, 64
        %v858 = vpop.permute.xlu0 %857
        %859 = vrot.lane.b32.xlu0 %v520, 64
        %v860 = vpop.permute.xlu0 %859
        %861 = vrot.lane.b32.xlu0 %v523, 64
        %v862 = vpop.permute.xlu0 %861
        %863 = vrot.lane.b32.xlu0 %v525, 64
        %v864 = vpop.permute.xlu0 %863
        %865 = vrot.lane.b32.xlu0 %v528, 64
        %v866 = vpop.permute.xlu0 %865
        %867 = vrot.lane.b32.xlu0 %v530, 64
        %v868 = vpop.permute.xlu0 %867
        %869 = vrot.lane.b32.xlu0 %v685, 64
        %v870 = vpop.permute.xlu0 %869
        %871 = vrot.lane.b32.xlu0 %v687, 64
        %v872 = vpop.permute.xlu0 %871
        %873 = vrot.lane.b32.xlu0 %v842, 64
        %v874 = vpop.permute.xlu0 %873
        %875 = vrot.lane.b32.xlu0 %v844, 64
        %v876 = vpop.permute.xlu0 %875
        %v893 = vsel %vm272, %v347, %v443
        %v894 = vsel %vm272, %v348, %v445
        %v895 = vsel %vm272, %v350, %v447
        %v896 = vsel %vm272, %v351, %v449
        %v897 = vsel %vm272, %v353, %v451
        %v898 = vsel %vm272, %v354, %v453
        %v899 = vsel %vm272, %v356, %v455
        %v900 = vsel %vm272, %v357, %v457
        %v901 = vsel %vm272, %v359, %v459
        %v902 = vsel %vm272, %v360, %v461
        %v903 = vsel %vm272, %v362, %v463
        %v904 = vsel %vm272, %v363, %v465
        %v905 = vsel %vm272, %v365, %v467
        %v906 = vsel %vm272, %v366, %v469
        %v907 = vsel %vm272, %v368, %v471
        %v908 = vsel %vm272, %v369, %v473
        %vm909 = vcmask 130048
        %v910 = vsel %vm909, %v893, %v532
        %v911 = vsel %vm909, %v894, %v534
        %v912 = vsel %vm909, %v895, %v536
        %v913 = vsel %vm909, %v896, %v538
        %v914 = vsel %vm909, %v897, %v540
        %v915 = vsel %vm909, %v898, %v542
        %v916 = vsel %vm909, %v899, %v544
        %v917 = vsel %vm909, %v900, %v546
        %v918 = vsel %vm909, %v901, %v548
        %v919 = vsel %vm909, %v902, %v550
        %v920 = vsel %vm909, %v903, %v552
        %v921 = vsel %vm909, %v904, %v554
        %v922 = vsel %vm909, %v905, %v556
        %v923 = vsel %vm909, %v906, %v558
        %v924 = vsel %vm909, %v907, %v560
        %v925 = vsel %vm909, %v908, %v562
        %vm926 = vcmask 195584
        %v927 = vsel %vm926, %v910, %v582
        %v928 = vsel %vm926, %v911, %v584
        %v929 = vsel %vm926, %v912, %v586
        %v930 = vsel %vm926, %v913, %v588
        %v931 = vsel %vm926, %v914, %v590
        %v932 = vsel %vm926, %v915, %v592
        %v933 = vsel %vm926, %v916, %v594
        %v934 = vsel %vm926, %v917, %v596
        %v935 = vsel %vm926, %v918, %v598
        %v936 = vsel %vm926, %v919, %v600
        %v937 = vsel %vm926, %v920, %v602
        %v938 = vsel %vm926, %v921, %v604
        %v939 = vsel %vm926, %v922, %v606
        %v940 = vsel %vm926, %v923, %v608
        %v941 = vsel %vm926, %v924, %v610
        %v942 = vsel %vm926, %v925, %v612
        %vm943 = vcmask 261120
        %v944 = vsel %vm943, %v927, %v636
        %v945 = vsel %vm943, %v928, %v638
        %v946 = vsel %vm943, %v929, %v640
        %v947 = vsel %vm943, %v930, %v642
        %v948 = vsel %vm943, %v931, %v644
        %v949 = vsel %vm943, %v932, %v646
        %v950 = vsel %vm943, %v933, %v648
        %v951 = vsel %vm943, %v934, %v650
        %v952 = vsel %vm943, %v935, %v652
        %v953 = vsel %vm943, %v936, %v654
        %v954 = vsel %vm943, %v937, %v656
        %v955 = vsel %vm943, %v938, %v658
        %v956 = vsel %vm943, %v939, %v660
        %v957 = vsel %vm943, %v940, %v662
        %v958 = vsel %vm943, %v941, %v664
        %v959 = vsel %vm943, %v942, %v666
        %vm960 = vcmask 326656
        %v961 = vsel %vm960, %v944, %v689
        %v962 = vsel %vm960, %v945, %v691
        %v963 = vsel %vm960, %v946, %v693
        %v964 = vsel %vm960, %v947, %v695
        %v965 = vsel %vm960, %v948, %v697
        %v966 = vsel %vm960, %v949, %v699
        %v967 = vsel %vm960, %v950, %v701
        %v968 = vsel %vm960, %v951, %v703
        %v969 = vsel %vm960, %v952, %v705
        %v970 = vsel %vm960, %v953, %v707
        %v971 = vsel %vm960, %v954, %v709
        %v972 = vsel %vm960, %v955, %v711
        %v973 = vsel %vm960, %v956, %v713
        %v974 = vsel %vm960, %v957, %v715
        %v975 = vsel %vm960, %v958, %v717
        %v976 = vsel %vm960, %v959, %v719
        %vm977 = vcmask 392192
        %v978 = vsel %vm977, %v961, %v739
        %v979 = vsel %vm977, %v962, %v741
        %v980 = vsel %vm977, %v963, %v743
        %v981 = vsel %vm977, %v964, %v745
        %v982 = vsel %vm977, %v965, %v747
        %v983 = vsel %vm977, %v966, %v749
        %v984 = vsel %vm977, %v967, %v751
        %v985 = vsel %vm977, %v968, %v753
        %v986 = vsel %vm977, %v969, %v755
        %v987 = vsel %vm977, %v970, %v757
        %v988 = vsel %vm977, %v971, %v759
        %v989 = vsel %vm977, %v972, %v761
        %v990 = vsel %vm977, %v973, %v763
        %v991 = vsel %vm977, %v974, %v765
        %v992 = vsel %vm977, %v975, %v767
        %v993 = vsel %vm977, %v976, %v769
        %vm994 = vcmask 457728
        %v995 = vsel %vm994, %v978, %v793
        %v996 = vsel %vm994, %v979, %v795
        %v997 = vsel %vm994, %v980, %v797
        %v998 = vsel %vm994, %v981, %v799
        %v999 = vsel %vm994, %v982, %v801
        %v1000 = vsel %vm994, %v983, %v803
        %v1001 = vsel %vm994, %v984, %v805
        %v1002 = vsel %vm994, %v985, %v807
        %v1003 = vsel %vm994, %v986, %v809
        %v1004 = vsel %vm994, %v987, %v811
        %v1005 = vsel %vm994, %v988, %v813
        %v1006 = vsel %vm994, %v989, %v815
        %v1007 = vsel %vm994, %v990, %v817
        %v1008 = vsel %vm994, %v991, %v819
        %v1009 = vsel %vm994, %v992, %v821
        %v1010 = vsel %vm994, %v993, %v823
        %vm1011 = vcmask 523264
        %v1012 = vsel %vm1011, %v995, %v846
        %v1013 = vsel %vm1011, %v996, %v848
        %v1014 = vsel %vm1011, %v997, %v850
        %v1015 = vsel %vm1011, %v998, %v852
        %v1016 = vsel %vm1011, %v999, %v854
        %v1017 = vsel %vm1011, %v1000, %v856
        %v1018 = vsel %vm1011, %v1001, %v858
        %v1019 = vsel %vm1011, %v1002, %v860
        %v1020 = vsel %vm1011, %v1003, %v862
        %v1021 = vsel %vm1011, %v1004, %v864
        %v1022 = vsel %vm1011, %v1005, %v866
        %v1023 = vsel %vm1011, %v1006, %v868
        %v1024 = vsel %vm1011, %v1007, %v870
        %v1025 = vsel %vm1011, %v1008, %v872
        %v1026 = vsel %vm1011, %v1009, %v874
        %v1027 = vsel %vm1011, %v1010, %v876
        %v1029 = vlaneseq
        %v1030 = vshrl.u32 %v1029, 7
        %v1031 = vsub.s32 0, %v1030
        %v1032 = vrot.slane %v327, %v1031
        %vm1034 = vcmask 588800
        %v1036 = vsel %vm1034, %v1012, 0
        %v1039 = vsel %vm1034, %v1013, 0
        %v1042 = vsel %vm1034, %v1014, 0
        %v1045 = vsel %vm1034, %v1015, 0
        %v1048 = vsel %vm1034, %v1016, 0
        %v1051 = vsel %vm1034, %v1017, 0
        %v1054 = vsel %vm1034, %v1018, 0
        %v1057 = vsel %vm1034, %v1019, 0
        %v1060 = vsel %vm1034, %v1020, 0
        %v1063 = vsel %vm1034, %v1021, 0
        %v1066 = vsel %vm1034, %v1022, 0
        %v1069 = vsel %vm1034, %v1023, 0
        %v1072 = vsel %vm1034, %v1024, 0
        %v1075 = vsel %vm1034, %v1025, 0
        %v1078 = vsel %vm1034, %v1026, 0
        %v1081 = vsel %vm1034, %v1027, 0
        %1083 = vmatprep.subr.mxu0 0.0
        %1084 = vmatpush1.msra.mxu0 %v318
        %1085 = vmatprep.subr.mxu0 0.0
        %1086 = vmatpush1.msra.mxu0 %v319
        %1087 = vmatprep.subr.mxu0 0.0
        %1088 = vmatpush1.msra.mxu0 %v320
        %1089 = vmatprep.subr.mxu0 0.0
        %1090 = vmatpush1.msra.mxu0 %v321
        %1091 = vmatprep.subr.mxu0 0.0
        %1092 = vmatpush1.msra.mxu0 %v322
        %1093 = vmatprep.subr.mxu0 0.0
        %1094 = vmatpush1.msra.mxu0 %v323
        %1095 = vmatprep.subr.mxu0 0.0
        %1096 = vmatpush1.msra.mxu0 %v324
        %1097 = vmatprep.subr.mxu0 0.0
        %1098 = vmatpush1.msra.mxu0 %v325
        %1099 = vmatprep.subr.mxu0 0.0
        %1100 = vmatpush1.msra.mxu0 %v326
        %1101 = vmatprep.subr.mxu0 0.0
        %1102 = vmatpush1.msra.mxu0 0.0
        %1103 = vmatprep.subr.mxu0 0.0
        %1104 = vmatpush1.msra.mxu0 0.0
        %1105 = vmatprep.subr.mxu0 0.0
        %1106 = vmatpush1.msra.mxu0 0.0
        %1107 = vmatprep.subr.mxu0 0.0
        %1108 = vmatpush1.msra.mxu0 0.0
        %1109 = vmatprep.subr.mxu0 0.0
        %1110 = vmatpush1.msra.mxu0 0.0
        %1111 = vmatprep.subr.mxu0 0.0
        %1112 = vmatpush1.msra.mxu0 0.0
        %1113 = vmatprep.subr.mxu0 0.0
        %1114 = vmatpush1.msra.mxu0 0.0
        %1115 = vmatprep.subr.mxu0 0.0
        %1116 = vmatpush1.msra.mxu0 0.0
        %1117 = vmatprep.subr.mxu0 0.0
        %1118 = vmatpush1.msra.mxu0 0.0
        %1119 = vmatprep.subr.mxu0 0.0
        %1120 = vmatpush1.msra.mxu0 0.0
        %1121 = vmatprep.subr.mxu0 0.0
        %1122 = vmatpush1.msra.mxu0 0.0
        %1123 = vmatprep.subr.mxu0 0.0
        %1124 = vmatpush1.msra.mxu0 0.0
        %1125 = vmatprep.subr.mxu0 0.0
        %1126 = vmatpush1.msra.mxu0 0.0
        %1127 = vmatprep.subr.mxu0 0.0
        %1128 = vmatpush1.msra.mxu0 0.0
        %1129 = vmatprep.subr.mxu0 0.0
        %1130 = vmatpush1.msra.mxu0 0.0
        %1131 = vmatprep.subr.mxu0 0.0
        %1132 = vmatpush1.msra.mxu0 0.0
        %1133 = vmatprep.subr.mxu0 0.0
        %1134 = vmatpush1.msra.mxu0 0.0
        %1135 = vmatprep.subr.mxu0 0.0
        %1136 = vmatpush1.msra.mxu0 0.0
        %1137 = vmatprep.subr.mxu0 0.0
        %1138 = vmatpush1.msra.mxu0 0.0
        %1139 = vmatprep.subr.mxu0 0.0
        %1140 = vmatpush1.msra.mxu0 0.0
        %1141 = vmatprep.subr.mxu0 0.0
        %1142 = vmatpush1.msra.mxu0 0.0
        %1143 = vmatprep.subr.mxu0 0.0
        %1144 = vmatpush1.msra.mxu0 0.0
        %1145 = vmatprep.subr.mxu0 0.0
        %1146 = vmatpush1.msra.mxu0 0.0
        %1147 = vmatprep.mubr.f32.mxu0 0.0
        %1148 = vmatmul.mubr.f32.gmra.mrb[0].mxu0 %v1036
        %v1149 = vpop.f32.mrb[0].mxu0
        %v1150 = vadd.f32 %v1032, %v1149
        %v1151 = vpop.f32.mrb[0].mxu0
        %1152 = vmatprep.mubr.f32.mxu0 0.0
        %1153 = vmatmul.mubr.f32.gmra.mrb[0].mxu0 %v1039
        %v1154 = vpop.f32.mrb[0].mxu0
        %v1155 = vadd.f32 %v1032, %v1154
        %v1156 = vpop.f32.mrb[0].mxu0
        %1157 = vmatprep.mubr.f32.mxu0 0.0
        %1158 = vmatmul.mubr.f32.gmra.mrb[0].mxu0 %v1042
        %v1159 = vpop.f32.mrb[0].mxu0
        %v1160 = vadd.f32 %v1032, %v1159
        %v1161 = vpop.f32.mrb[0].mxu0
        %1162 = vmatprep.mubr.f32.mxu0 0.0
        %1163 = vmatmul.mubr.f32.gmra.mrb[0].mxu0 %v1045
        %v1164 = vpop.f32.mrb[0].mxu0
        %v1165 = vadd.f32 %v1032, %v1164
        %v1166 = vpop.f32.mrb[0].mxu0
        %1167 = vmatprep.mubr.f32.mxu0 0.0
        %1168 = vmatmul.mubr.f32.gmra.mrb[0].mxu0 %v1048
        %v1169 = vpop.f32.mrb[0].mxu0
        %v1170 = vadd.f32 %v1032, %v1169
        %v1171 = vpop.f32.mrb[0].mxu0
        %1172 = vmatprep.mubr.f32.mxu0 0.0
        %1173 = vmatmul.mubr.f32.gmra.mrb[0].mxu0 %v1051
        %v1174 = vpop.f32.mrb[0].mxu0
        %v1175 = vadd.f32 %v1032, %v1174
        %v1176 = vpop.f32.mrb[0].mxu0
        %1177 = vmatprep.mubr.f32.mxu0 0.0
        %1178 = vmatmul.mubr.f32.gmra.mrb[0].mxu0 %v1054
        %v1179 = vpop.f32.mrb[0].mxu0
        %v1180 = vadd.f32 %v1032, %v1179
        %v1181 = vpop.f32.mrb[0].mxu0
        %1182 = vmatprep.mubr.f32.mxu0 0.0
        %1183 = vmatmul.mubr.f32.gmra.mrb[0].mxu0 %v1057
        %v1184 = vpop.f32.mrb[0].mxu0
        %v1185 = vadd.f32 %v1032, %v1184
        %v1186 = vpop.f32.mrb[0].mxu0
        %1187 = vmatprep.mubr.f32.mxu0 0.0
        %1188 = vmatmul.mubr.f32.gmra.mrb[0].mxu0 %v1060
        %v1189 = vpop.f32.mrb[0].mxu0
        %v1190 = vadd.f32 %v1032, %v1189
        %v1191 = vpop.f32.mrb[0].mxu0
        %1192 = vmatprep.mubr.f32.mxu0 0.0
        %1193 = vmatmul.mubr.f32.gmra.mrb[0].mxu0 %v1063
        %v1194 = vpop.f32.mrb[0].mxu0
        %v1195 = vadd.f32 %v1032, %v1194
        %v1196 = vpop.f32.mrb[0].mxu0
        %1197 = vmatprep.mubr.f32.mxu0 0.0
        %1198 = vmatmul.mubr.f32.gmra.mrb[0].mxu0 %v1066
        %v1199 = vpop.f32.mrb[0].mxu0
        %v1200 = vadd.f32 %v1032, %v1199
        %v1201 = vpop.f32.mrb[0].mxu0
        %1202 = vmatprep.mubr.f32.mxu0 0.0
        %1203 = vmatmul.mubr.f32.gmra.mrb[0].mxu0 %v1069
        %v1204 = vpop.f32.mrb[0].mxu0
        %v1205 = vadd.f32 %v1032, %v1204
        %v1206 = vpop.f32.mrb[0].mxu0
        %1207 = vmatprep.mubr.f32.mxu0 0.0
        %1208 = vmatmul.mubr.f32.gmra.mrb[0].mxu0 %v1072
        %v1209 = vpop.f32.mrb[0].mxu0
        %v1210 = vadd.f32 %v1032, %v1209
        %v1211 = vpop.f32.mrb[0].mxu0
        %1212 = vmatprep.mubr.f32.mxu0 0.0
        %1213 = vmatmul.mubr.f32.gmra.mrb[0].mxu0 %v1075
        %v1214 = vpop.f32.mrb[0].mxu0
        %v1215 = vadd.f32 %v1032, %v1214
        %v1216 = vpop.f32.mrb[0].mxu0
        %1217 = vmatprep.mubr.f32.mxu0 0.0
        %1218 = vmatmul.mubr.f32.gmra.mrb[0].mxu0 %v1078
        %v1219 = vpop.f32.mrb[0].mxu0
        %v1220 = vadd.f32 %v1032, %v1219
        %v1221 = vpop.f32.mrb[0].mxu0
        %1222 = vmatprep.mubr.f32.mxu0 0.0
        %1223 = vmatmul.mubr.f32.gmra.mrb[0].mxu0 %v1081
        %v1224 = vpop.f32.mrb[0].mxu0
        %v1225 = vadd.f32 %v1032, %v1224
        %v1226 = vpop.f32.mrb[0].mxu0
        %1227 = vdwg.mxu0
        %v1228 = vmax.f32 %v1150, 0.0
        %v1229 = vmax.f32 %v1155, 0.0
        %v1230 = vmax.f32 %v1160, 0.0
        %v1231 = vmax.f32 %v1165, 0.0
        %v1232 = vmax.f32 %v1170, 0.0
        %v1233 = vmax.f32 %v1175, 0.0
        %v1234 = vmax.f32 %v1180, 0.0
        %v1235 = vmax.f32 %v1185, 0.0
        %v1236 = vmax.f32 %v1190, 0.0
        %v1237 = vmax.f32 %v1195, 0.0
        %v1238 = vmax.f32 %v1200, 0.0
        %v1239 = vmax.f32 %v1205, 0.0
        %v1240 = vmax.f32 %v1210, 0.0
        %v1241 = vmax.f32 %v1215, 0.0
        %v1242 = vmax.f32 %v1220, 0.0
        %v1243 = vmax.f32 %v1225, 0.0
        %s1244 = sadd.s32 %s344, 1
        %s1245 = smul.u32 %s1244, 24
        %s1246 = scalar_lea.vmem [#allocation2], %s1245
        %1247 = vst.msk [vmem:[%s1246 + $0x1] sm:$0xff] %vm272, %v1228
        %1248 = vst.msk [vmem:[%s1246 + $0x9] sm:$0xff] %vm272, %v1229
        %1249 = vst.msk [vmem:[%s1246 + $0x19] sm:$0xff] %vm272, %v1230
        %1250 = vst.msk [vmem:[%s1246 + $0x21] sm:$0xff] %vm272, %v1231
        %1251 = vst.msk [vmem:[%s1246 + $0x31] sm:$0xff] %vm272, %v1232
        %1252 = vst.msk [vmem:[%s1246 + $0x39] sm:$0xff] %vm272, %v1233
        %1253 = vst.msk [vmem:[%s1246 + $0x49] sm:$0xff] %vm272, %v1234
        %1254 = vst.msk [vmem:[%s1246 + $0x51] sm:$0xff] %vm272, %v1235
        %1255 = vst.msk [vmem:[%s1246 + $0x61] sm:$0xff] %vm272, %v1236
        %1256 = vst.msk [vmem:[%s1246 + $0x69] sm:$0xff] %vm272, %v1237
        %1257 = vst.msk [vmem:[%s1246 + $0x79] sm:$0xff] %vm272, %v1238
        %1258 = vst.msk [vmem:[%s1246 + $0x81] sm:$0xff] %vm272, %v1239
        %1259 = vst.msk [vmem:[%s1246 + $0x91] sm:$0xff] %vm272, %v1240
        %1260 = vst.msk [vmem:[%s1246 + $0x99] sm:$0xff] %vm272, %v1241
        %1261 = vst.msk [vmem:[%s1246 + $0xa9] sm:$0xff] %vm272, %v1242
        %1262 = vst.msk [vmem:[%s1246 + $0xb1] sm:$0xff] %vm272, %v1243
      $region49: #{basic_block.1} parent=43 // loop_footer
        %s343 = sadd.s32 1, %s339
      $region50: #{basic_block.1} parent=43 // loop_footer_branch
        %338 = sbr.rel target = $region46
      $region51: #{basic_block.1} parent=43 // loop_exit
        _
      loop: start=0, step=1, limit=2
      $region52: #{basic_block.1} parent=43 // loop_pre_header
        _
      $region53: #{basic_block.1} parent=43 // loop_header
        %s1264 = sphi 0, %s1268
        %p1265 = scmp.ge.s32.totalorder %s1264, 2
      $region54: #{basic_block.1} parent=43 // loop_header_branch
        %1267 = sbr.rel (%p1265) target = $region58
      $region55: #{basic_block.1} parent=43 // loop_body
        %s1269 = smul.u32 %s1264, 8
        %s1270 = smul.u32 %s1269, 24
        %s1271 = scalar_lea.vmem [#allocation2], %s1270
        %v1272 = vld [vmem:[%s1271] sm:$0xff]
        %v1273 = vld [vmem:[%s1271 + $0x8] sm:$0xff]
        %v1274 = vld [vmem:[%s1271 + $0x10] sm:$0x3]
        %v1275 = vld [vmem:[%s1271 + $0x18] sm:$0xff]
        %v1276 = vld [vmem:[%s1271 + $0x20] sm:$0xff]
        %v1277 = vld [vmem:[%s1271 + $0x28] sm:$0x3]
        %v1278 = vld [vmem:[%s1271 + $0x30] sm:$0xff]
        %v1279 = vld [vmem:[%s1271 + $0x38] sm:$0xff]
        %v1280 = vld [vmem:[%s1271 + $0x40] sm:$0x3]
        %v1281 = vld [vmem:[%s1271 + $0x48] sm:$0xff]
        %v1282 = vld [vmem:[%s1271 + $0x50] sm:$0xff]
        %v1283 = vld [vmem:[%s1271 + $0x58] sm:$0x3]
        %v1284 = vld [vmem:[%s1271 + $0x60] sm:$0xff]
        %v1285 = vld [vmem:[%s1271 + $0x68] sm:$0xff]
        %v1286 = vld [vmem:[%s1271 + $0x70] sm:$0x3]
        %v1287 = vld [vmem:[%s1271 + $0x78] sm:$0xff]
        %v1288 = vld [vmem:[%s1271 + $0x80] sm:$0xff]
        %v1289 = vld [vmem:[%s1271 + $0x88] sm:$0x3]
        %v1290 = vld [vmem:[%s1271 + $0x90] sm:$0xff]
        %v1291 = vld [vmem:[%s1271 + $0x98] sm:$0xff]
        %v1292 = vld [vmem:[%s1271 + $0xa0] sm:$0x3]
        %v1293 = vld [vmem:[%s1271 + $0xa8] sm:$0xff]
        %v1294 = vld [vmem:[%s1271 + $0xb0] sm:$0xff]
        %v1295 = vld [vmem:[%s1271 + $0xb8] sm:$0x3]
        %v1296 = vld [vmem:[%s1271 + $0xc0] sm:$0xff]
        %v1297 = vld [vmem:[%s1271 + $0xc8] sm:$0xff]
        %v1298 = vld [vmem:[%s1271 + $0xd0] sm:$0x3]
        %v1299 = vld [vmem:[%s1271 + $0xd8] sm:$0xff]
        %v1300 = vld [vmem:[%s1271 + $0xe0] sm:$0xff]
        %v1301 = vld [vmem:[%s1271 + $0xe8] sm:$0x3]
        %vm1326 = vcmask 1046528
        %v1327 = vrot.slane %v1272, 1
        %v1328 = vrot.slane %v1273, 1
        %v1329 = vsel %vm1326, %v1327, %v1328
        %v1330 = vrot.slane %v1274, 1
        %v1331 = vsel %vm1326, %v1328, %v1330
        %v1332 = vrot.slane %v1275, 1
        %v1333 = vrot.slane %v1276, 1
        %v1334 = vsel %vm1326, %v1332, %v1333
        %v1335 = vrot.slane %v1277, 1
        %v1336 = vsel %vm1326, %v1333, %v1335
        %v1337 = vrot.slane %v1278, 1
        %v1338 = vrot.slane %v1279, 1
        %v1339 = vsel %vm1326, %v1337, %v1338
        %v1340 = vrot.slane %v1280, 1
        %v1341 = vsel %vm1326, %v1338, %v1340
        %v1342 = vrot.slane %v1281, 1
        %v1343 = vrot.slane %v1282, 1
        %v1344 = vsel %vm1326, %v1342, %v1343
        %v1345 = vrot.slane %v1283, 1
        %v1346 = vsel %vm1326, %v1343, %v1345
        %v1347 = vrot.slane %v1284, 1
        %v1348 = vrot.slane %v1285, 1
        %v1349 = vsel %vm1326, %v1347, %v1348
        %v1350 = vrot.slane %v1286, 1
        %v1351 = vsel %vm1326, %v1348, %v1350
        %v1352 = vrot.slane %v1287, 1
        %v1353 = vrot.slane %v1288, 1
        %v1354 = vsel %vm1326, %v1352, %v1353
        %v1355 = vrot.slane %v1289, 1
        %v1356 = vsel %vm1326, %v1353, %v1355
        %v1357 = vrot.slane %v1290, 1
        %v1358 = vrot.slane %v1291, 1
        %v1359 = vsel %vm1326, %v1357, %v1358
        %v1360 = vrot.slane %v1292, 1
        %v1361 = vsel %vm1326, %v1358, %v1360
        %v1362 = vrot.slane %v1293, 1
        %v1363 = vrot.slane %v1294, 1
        %v1364 = vsel %vm1326, %v1362, %v1363
        %v1365 = vrot.slane %v1295, 1
        %v1366 = vsel %vm1326, %v1363, %v1365
        %1367 = vrot.lane.b32.xlu0 %v1329, 8
        %v1368 = vpop.permute.xlu0 %1367
        %1369 = vrot.lane.b32.xlu0 %v1331, 8
        %v1370 = vpop.permute.xlu0 %1369
        %1371 = vrot.lane.b32.xlu0 %v1334, 8
        %v1372 = vpop.permute.xlu0 %1371
        %1373 = vrot.lane.b32.xlu0 %v1336, 8
        %v1374 = vpop.permute.xlu0 %1373
        %1375 = vrot.lane.b32.xlu0 %v1339, 8
        %v1376 = vpop.permute.xlu0 %1375
        %1377 = vrot.lane.b32.xlu0 %v1341, 8
        %v1378 = vpop.permute.xlu0 %1377
        %1379 = vrot.lane.b32.xlu0 %v1344, 8
        %v1380 = vpop.permute.xlu0 %1379
        %1381 = vrot.lane.b32.xlu0 %v1346, 8
        %v1382 = vpop.permute.xlu0 %1381
        %1383 = vrot.lane.b32.xlu0 %v1349, 8
        %v1384 = vpop.permute.xlu0 %1383
        %1385 = vrot.lane.b32.xlu0 %v1351, 8
        %v1386 = vpop.permute.xlu0 %1385
        %1387 = vrot.lane.b32.xlu0 %v1354, 8
        %v1388 = vpop.permute.xlu0 %1387
        %1389 = vrot.lane.b32.xlu0 %v1356, 8
        %v1390 = vpop.permute.xlu0 %1389
        %1391 = vrot.lane.b32.xlu0 %v1359, 8
        %v1392 = vpop.permute.xlu0 %1391
        %1393 = vrot.lane.b32.xlu0 %v1361, 8
        %v1394 = vpop.permute.xlu0 %1393
        %1395 = vrot.lane.b32.xlu0 %v1364, 8
        %v1396 = vpop.permute.xlu0 %1395
        %1397 = vrot.lane.b32.xlu0 %v1366, 8
        %v1398 = vpop.permute.xlu0 %1397
        %vm1415 = vcmask 1045504
        %v1416 = vrot.slane %v1272, 2
        %v1417 = vrot.slane %v1273, 2
        %v1418 = vsel %vm1415, %v1416, %v1417
        %v1419 = vrot.slane %v1274, 2
        %v1420 = vsel %vm1415, %v1417, %v1419
        %v1421 = vrot.slane %v1275, 2
        %v1422 = vrot.slane %v1276, 2
        %v1423 = vsel %vm1415, %v1421, %v1422
        %v1424 = vrot.slane %v1277, 2
        %v1425 = vsel %vm1415, %v1422, %v1424
        %v1426 = vrot.slane %v1278, 2
        %v1427 = vrot.slane %v1279, 2
        %v1428 = vsel %vm1415, %v1426, %v1427
        %v1429 = vrot.slane %v1280, 2
        %v1430 = vsel %vm1415, %v1427, %v1429
        %v1431 = vrot.slane %v1281, 2
        %v1432 = vrot.slane %v1282, 2
        %v1433 = vsel %vm1415, %v1431, %v1432
        %v1434 = vrot.slane %v1283, 2
        %v1435 = vsel %vm1415, %v1432, %v1434
        %v1436 = vrot.slane %v1284, 2
        %v1437 = vrot.slane %v1285, 2
        %v1438 = vsel %vm1415, %v1436, %v1437
        %v1439 = vrot.slane %v1286, 2
        %v1440 = vsel %vm1415, %v1437, %v1439
        %v1441 = vrot.slane %v1287, 2
        %v1442 = vrot.slane %v1288, 2
        %v1443 = vsel %vm1415, %v1441, %v1442
        %v1444 = vrot.slane %v1289, 2
        %v1445 = vsel %vm1415, %v1442, %v1444
        %v1446 = vrot.slane %v1290, 2
        %v1447 = vrot.slane %v1291, 2
        %v1448 = vsel %vm1415, %v1446, %v1447
        %v1449 = vrot.slane %v1292, 2
        %v1450 = vsel %vm1415, %v1447, %v1449
        %v1451 = vrot.slane %v1293, 2
        %v1452 = vrot.slane %v1294, 2
        %v1453 = vsel %vm1415, %v1451, %v1452
        %v1454 = vrot.slane %v1295, 2
        %v1455 = vsel %vm1415, %v1452, %v1454
        %1456 = vrot.lane.b32.xlu0 %v1418, 16
        %v1457 = vpop.permute.xlu0 %1456
        %1458 = vrot.lane.b32.xlu0 %v1420, 16
        %v1459 = vpop.permute.xlu0 %1458
        %1460 = vrot.lane.b32.xlu0 %v1423, 16
        %v1461 = vpop.permute.xlu0 %1460
        %1462 = vrot.lane.b32.xlu0 %v1425, 16
        %v1463 = vpop.permute.xlu0 %1462
        %1464 = vrot.lane.b32.xlu0 %v1428, 16
        %v1465 = vpop.permute.xlu0 %1464
        %1466 = vrot.lane.b32.xlu0 %v1430, 16
        %v1467 = vpop.permute.xlu0 %1466
        %1468 = vrot.lane.b32.xlu0 %v1433, 16
        %v1469 = vpop.permute.xlu0 %1468
        %1470 = vrot.lane.b32.xlu0 %v1435, 16
        %v1471 = vpop.permute.xlu0 %1470
        %1472 = vrot.lane.b32.xlu0 %v1438, 16
        %v1473 = vpop.permute.xlu0 %1472
        %1474 = vrot.lane.b32.xlu0 %v1440, 16
        %v1475 = vpop.permute.xlu0 %1474
        %1476 = vrot.lane.b32.xlu0 %v1443, 16
        %v1477 = vpop.permute.xlu0 %1476
        %1478 = vrot.lane.b32.xlu0 %v1445, 16
        %v1479 = vpop.permute.xlu0 %1478
        %1480 = vrot.lane.b32.xlu0 %v1448, 16
        %v1481 = vpop.permute.xlu0 %1480
        %1482 = vrot.lane.b32.xlu0 %v1450, 16
        %v1483 = vpop.permute.xlu0 %1482
        %1484 = vrot.lane.b32.xlu0 %v1453, 16
        %v1485 = vpop.permute.xlu0 %1484
        %1486 = vrot.lane.b32.xlu0 %v1455, 16
        %v1487 = vpop.permute.xlu0 %1486
        %1506 = vrot.lane.b32.xlu0 %v1275, 24
        %v1507 = vpop.permute.xlu0 %1506
        %1508 = vrot.lane.b32.xlu0 %v1276, 24
        %v1509 = vpop.permute.xlu0 %1508
        %1510 = vrot.lane.b32.xlu0 %v1278, 24
        %v1511 = vpop.permute.xlu0 %1510
        %1512 = vrot.lane.b32.xlu0 %v1279, 24
        %v1513 = vpop.permute.xlu0 %1512
        %1514 = vrot.lane.b32.xlu0 %v1281, 24
        %v1515 = vpop.permute.xlu0 %1514
        %1516 = vrot.lane.b32.xlu0 %v1282, 24
        %v1517 = vpop.permute.xlu0 %1516
        %1518 = vrot.lane.b32.xlu0 %v1284, 24
        %v1519 = vpop.permute.xlu0 %1518
        %1520 = vrot.lane.b32.xlu0 %v1285, 24
        %v1521 = vpop.permute.xlu0 %1520
        %1522 = vrot.lane.b32.xlu0 %v1287, 24
        %v1523 = vpop.permute.xlu0 %1522
        %1524 = vrot.lane.b32.xlu0 %v1288, 24
        %v1525 = vpop.permute.xlu0 %1524
        %1526 = vrot.lane.b32.xlu0 %v1290, 24
        %v1527 = vpop.permute.xlu0 %1526
        %1528 = vrot.lane.b32.xlu0 %v1291, 24
        %v1529 = vpop.permute.xlu0 %1528
        %1530 = vrot.lane.b32.xlu0 %v1293, 24
        %v1531 = vpop.permute.xlu0 %1530
        %1532 = vrot.lane.b32.xlu0 %v1294, 24
        %v1533 = vpop.permute.xlu0 %1532
        %1534 = vrot.lane.b32.xlu0 %v1296, 24
        %v1535 = vpop.permute.xlu0 %1534
        %1536 = vrot.lane.b32.xlu0 %v1297, 24
        %v1537 = vpop.permute.xlu0 %1536
        %v1555 = vrot.slane %v1296, 1
        %v1556 = vrot.slane %v1297, 1
        %v1557 = vsel %vm1326, %v1555, %v1556
        %v1558 = vrot.slane %v1298, 1
        %v1559 = vsel %vm1326, %v1556, %v1558
        %1560 = vrot.lane.b32.xlu0 %v1334, 32
        %v1561 = vpop.permute.xlu0 %1560
        %1562 = vrot.lane.b32.xlu0 %v1336, 32
        %v1563 = vpop.permute.xlu0 %1562
        %1564 = vrot.lane.b32.xlu0 %v1339, 32
        %v1565 = vpop.permute.xlu0 %1564
        %1566 = vrot.lane.b32.xlu0 %v1341, 32
        %v1567 = vpop.permute.xlu0 %1566
        %1568 = vrot.lane.b32.xlu0 %v1344, 32
        %v1569 = vpop.permute.xlu0 %1568
        %1570 = vrot.lane.b32.xlu0 %v1346, 32
        %v1571 = vpop.permute.xlu0 %1570
        %1572 = vrot.lane.b32.xlu0 %v1349, 32
        %v1573 = vpop.permute.xlu0 %1572
        %1574 = vrot.lane.b32.xlu0 %v1351, 32
        %v1575 = vpop.permute.xlu0 %1574
        %1576 = vrot.lane.b32.xlu0 %v1354, 32
        %v1577 = vpop.permute.xlu0 %1576
        %1578 = vrot.lane.b32.xlu0 %v1356, 32
        %v1579 = vpop.permute.xlu0 %1578
        %1580 = vrot.lane.b32.xlu0 %v1359, 32
        %v1581 = vpop.permute.xlu0 %1580
        %1582 = vrot.lane.b32.xlu0 %v1361, 32
        %v1583 = vpop.permute.xlu0 %1582
        %1584 = vrot.lane.b32.xlu0 %v1364, 32
        %v1585 = vpop.permute.xlu0 %1584
        %1586 = vrot.lane.b32.xlu0 %v1366, 32
        %v1587 = vpop.permute.xlu0 %1586
        %1588 = vrot.lane.b32.xlu0 %v1557, 32
        %v1589 = vpop.permute.xlu0 %1588
        %1590 = vrot.lane.b32.xlu0 %v1559, 32
        %v1591 = vpop.permute.xlu0 %1590
        %v1608 = vrot.slane %v1296, 2
        %v1609 = vrot.slane %v1297, 2
        %v1610 = vsel %vm1415, %v1608, %v1609
        %v1611 = vrot.slane %v1298, 2
        %v1612 = vsel %vm1415, %v1609, %v1611
        %1613 = vrot.lane.b32.xlu0 %v1423, 40
        %v1614 = vpop.permute.xlu0 %1613
        %1615 = vrot.lane.b32.xlu0 %v1425, 40
        %v1616 = vpop.permute.xlu0 %1615
        %1617 = vrot.lane.b32.xlu0 %v1428, 40
        %v1618 = vpop.permute.xlu0 %1617
        %1619 = vrot.lane.b32.xlu0 %v1430, 40
        %v1620 = vpop.permute.xlu0 %1619
        %1621 = vrot.lane.b32.xlu0 %v1433, 40
        %v1622 = vpop.permute.xlu0 %1621
        %1623 = vrot.lane.b32.xlu0 %v1435, 40
        %v1624 = vpop.permute.xlu0 %1623
        %1625 = vrot.lane.b32.xlu0 %v1438, 40
        %v1626 = vpop.permute.xlu0 %1625
        %1627 = vrot.lane.b32.xlu0 %v1440, 40
        %v1628 = vpop.permute.xlu0 %1627
        %1629 = vrot.lane.b32.xlu0 %v1443, 40
        %v1630 = vpop.permute.xlu0 %1629
        %1631 = vrot.lane.b32.xlu0 %v1445, 40
        %v1632 = vpop.permute.xlu0 %1631
        %1633 = vrot.lane.b32.xlu0 %v1448, 40
        %v1634 = vpop.permute.xlu0 %1633
        %1635 = vrot.lane.b32.xlu0 %v1450, 40
        %v1636 = vpop.permute.xlu0 %1635
        %1637 = vrot.lane.b32.xlu0 %v1453, 40
        %v1638 = vpop.permute.xlu0 %1637
        %1639 = vrot.lane.b32.xlu0 %v1455, 40
        %v1640 = vpop.permute.xlu0 %1639
        %1641 = vrot.lane.b32.xlu0 %v1610, 40
        %v1642 = vpop.permute.xlu0 %1641
        %1643 = vrot.lane.b32.xlu0 %v1612, 40
        %v1644 = vpop.permute.xlu0 %1643
        %1663 = vrot.lane.b32.xlu0 %v1278, 48
        %v1664 = vpop.permute.xlu0 %1663
        %1665 = vrot.lane.b32.xlu0 %v1279, 48
        %v1666 = vpop.permute.xlu0 %1665
        %1667 = vrot.lane.b32.xlu0 %v1281, 48
        %v1668 = vpop.permute.xlu0 %1667
        %1669 = vrot.lane.b32.xlu0 %v1282, 48
        %v1670 = vpop.permute.xlu0 %1669
        %1671 = vrot.lane.b32.xlu0 %v1284, 48
        %v1672 = vpop.permute.xlu0 %1671
        %1673 = vrot.lane.b32.xlu0 %v1285, 48
        %v1674 = vpop.permute.xlu0 %1673
        %1675 = vrot.lane.b32.xlu0 %v1287, 48
        %v1676 = vpop.permute.xlu0 %1675
        %1677 = vrot.lane.b32.xlu0 %v1288, 48
        %v1678 = vpop.permute.xlu0 %1677
        %1679 = vrot.lane.b32.xlu0 %v1290, 48
        %v1680 = vpop.permute.xlu0 %1679
        %1681 = vrot.lane.b32.xlu0 %v1291, 48
        %v1682 = vpop.permute.xlu0 %1681
        %1683 = vrot.lane.b32.xlu0 %v1293, 48
        %v1684 = vpop.permute.xlu0 %1683
        %1685 = vrot.lane.b32.xlu0 %v1294, 48
        %v1686 = vpop.permute.xlu0 %1685
        %1687 = vrot.lane.b32.xlu0 %v1296, 48
        %v1688 = vpop.permute.xlu0 %1687
        %1689 = vrot.lane.b32.xlu0 %v1297, 48
        %v1690 = vpop.permute.xlu0 %1689
        %1691 = vrot.lane.b32.xlu0 %v1299, 48
        %v1692 = vpop.permute.xlu0 %1691
        %1693 = vrot.lane.b32.xlu0 %v1300, 48
        %v1694 = vpop.permute.xlu0 %1693
        %v1712 = vrot.slane %v1299, 1
        %v1713 = vrot.slane %v1300, 1
        %v1714 = vsel %vm1326, %v1712, %v1713
        %v1715 = vrot.slane %v1301, 1
        %v1716 = vsel %vm1326, %v1713, %v1715
        %1717 = vrot.lane.b32.xlu0 %v1339, 56
        %v1718 = vpop.permute.xlu0 %1717
        %1719 = vrot.lane.b32.xlu0 %v1341, 56
        %v1720 = vpop.permute.xlu0 %1719
        %1721 = vrot.lane.b32.xlu0 %v1344, 56
        %v1722 = vpop.permute.xlu0 %1721
        %1723 = vrot.lane.b32.xlu0 %v1346, 56
        %v1724 = vpop.permute.xlu0 %1723
        %1725 = vrot.lane.b32.xlu0 %v1349, 56
        %v1726 = vpop.permute.xlu0 %1725
        %1727 = vrot.lane.b32.xlu0 %v1351, 56
        %v1728 = vpop.permute.xlu0 %1727
        %1729 = vrot.lane.b32.xlu0 %v1354, 56
        %v1730 = vpop.permute.xlu0 %1729
        %1731 = vrot.lane.b32.xlu0 %v1356, 56
        %v1732 = vpop.permute.xlu0 %1731
        %1733 = vrot.lane.b32.xlu0 %v1359, 56
        %v1734 = vpop.permute.xlu0 %1733
        %1735 = vrot.lane.b32.xlu0 %v1361, 56
        %v1736 = vpop.permute.xlu0 %1735
        %1737 = vrot.lane.b32.xlu0 %v1364, 56
        %v1738 = vpop.permute.xlu0 %1737
        %1739 = vrot.lane.b32.xlu0 %v1366, 56
        %v1740 = vpop.permute.xlu0 %1739
        %1741 = vrot.lane.b32.xlu0 %v1557, 56
        %v1742 = vpop.permute.xlu0 %1741
        %1743 = vrot.lane.b32.xlu0 %v1559, 56
        %v1744 = vpop.permute.xlu0 %1743
        %1745 = vrot.lane.b32.xlu0 %v1714, 56
        %v1746 = vpop.permute.xlu0 %1745
        %1747 = vrot.lane.b32.xlu0 %v1716, 56
        %v1748 = vpop.permute.xlu0 %1747
        %v1765 = vrot.slane %v1299, 2
        %v1766 = vrot.slane %v1300, 2
        %v1767 = vsel %vm1415, %v1765, %v1766
        %v1768 = vrot.slane %v1301, 2
        %v1769 = vsel %vm1415, %v1766, %v1768
        %1770 = vrot.lane.b32.xlu0 %v1428, 64
        %v1771 = vpop.permute.xlu0 %1770
        %1772 = vrot.lane.b32.xlu0 %v1430, 64
        %v1773 = vpop.permute.xlu0 %1772
        %1774 = vrot.lane.b32.xlu0 %v1433, 64
        %v1775 = vpop.permute.xlu0 %1774
        %1776 = vrot.lane.b32.xlu0 %v1435, 64
        %v1777 = vpop.permute.xlu0 %1776
        %1778 = vrot.lane.b32.xlu0 %v1438, 64
        %v1779 = vpop.permute.xlu0 %1778
        %1780 = vrot.lane.b32.xlu0 %v1440, 64
        %v1781 = vpop.permute.xlu0 %1780
        %1782 = vrot.lane.b32.xlu0 %v1443, 64
        %v1783 = vpop.permute.xlu0 %1782
        %1784 = vrot.lane.b32.xlu0 %v1445, 64
        %v1785 = vpop.permute.xlu0 %1784
        %1786 = vrot.lane.b32.xlu0 %v1448, 64
        %v1787 = vpop.permute.xlu0 %1786
        %1788 = vrot.lane.b32.xlu0 %v1450, 64
        %v1789 = vpop.permute.xlu0 %1788
        %1790 = vrot.lane.b32.xlu0 %v1453, 64
        %v1791 = vpop.permute.xlu0 %1790
        %1792 = vrot.lane.b32.xlu0 %v1455, 64
        %v1793 = vpop.permute.xlu0 %1792
        %1794 = vrot.lane.b32.xlu0 %v1610, 64
        %v1795 = vpop.permute.xlu0 %1794
        %1796 = vrot.lane.b32.xlu0 %v1612, 64
        %v1797 = vpop.permute.xlu0 %1796
        %1798 = vrot.lane.b32.xlu0 %v1767, 64
        %v1799 = vpop.permute.xlu0 %1798
        %1800 = vrot.lane.b32.xlu0 %v1769, 64
        %v1801 = vpop.permute.xlu0 %1800
        %v1818 = vsel %vm272, %v1272, %v1368
        %v1819 = vsel %vm272, %v1273, %v1370
        %v1820 = vsel %vm272, %v1275, %v1372
        %v1821 = vsel %vm272, %v1276, %v1374
        %v1822 = vsel %vm272, %v1278, %v1376
        %v1823 = vsel %vm272, %v1279, %v1378
        %v1824 = vsel %vm272, %v1281, %v1380
        %v1825 = vsel %vm272, %v1282, %v1382
        %v1826 = vsel %vm272, %v1284, %v1384
        %v1827 = vsel %vm272, %v1285, %v1386
        %v1828 = vsel %vm272, %v1287, %v1388
        %v1829 = vsel %vm272, %v1288, %v1390
        %v1830 = vsel %vm272, %v1290, %v1392
        %v1831 = vsel %vm272, %v1291, %v1394
        %v1832 = vsel %vm272, %v1293, %v1396
        %v1833 = vsel %vm272, %v1294, %v1398
        %vm1834 = vcmask 130048
        %v1835 = vsel %vm1834, %v1818, %v1457
        %v1836 = vsel %vm1834, %v1819, %v1459
        %v1837 = vsel %vm1834, %v1820, %v1461
        %v1838 = vsel %vm1834, %v1821, %v1463
        %v1839 = vsel %vm1834, %v1822, %v1465
        %v1840 = vsel %vm1834, %v1823, %v1467
        %v1841 = vsel %vm1834, %v1824, %v1469
        %v1842 = vsel %vm1834, %v1825, %v1471
        %v1843 = vsel %vm1834, %v1826, %v1473
        %v1844 = vsel %vm1834, %v1827, %v1475
        %v1845 = vsel %vm1834, %v1828, %v1477
        %v1846 = vsel %vm1834, %v1829, %v1479
        %v1847 = vsel %vm1834, %v1830, %v1481
        %v1848 = vsel %vm1834, %v1831, %v1483
        %v1849 = vsel %vm1834, %v1832, %v1485
        %v1850 = vsel %vm1834, %v1833, %v1487
        %vm1851 = vcmask 195584
        %v1852 = vsel %vm1851, %v1835, %v1507
        %v1853 = vsel %vm1851, %v1836, %v1509
        %v1854 = vsel %vm1851, %v1837, %v1511
        %v1855 = vsel %vm1851, %v1838, %v1513
        %v1856 = vsel %vm1851, %v1839, %v1515
        %v1857 = vsel %vm1851, %v1840, %v1517
        %v1858 = vsel %vm1851, %v1841, %v1519
        %v1859 = vsel %vm1851, %v1842, %v1521
        %v1860 = vsel %vm1851, %v1843, %v1523
        %v1861 = vsel %vm1851, %v1844, %v1525
        %v1862 = vsel %vm1851, %v1845, %v1527
        %v1863 = vsel %vm1851, %v1846, %v1529
        %v1864 = vsel %vm1851, %v1847, %v1531
        %v1865 = vsel %vm1851, %v1848, %v1533
        %v1866 = vsel %vm1851, %v1849, %v1535
        %v1867 = vsel %vm1851, %v1850, %v1537
        %vm1868 = vcmask 261120
        %v1869 = vsel %vm1868, %v1852, %v1561
        %v1870 = vsel %vm1868, %v1853, %v1563
        %v1871 = vsel %vm1868, %v1854, %v1565
        %v1872 = vsel %vm1868, %v1855, %v1567
        %v1873 = vsel %vm1868, %v1856, %v1569
        %v1874 = vsel %vm1868, %v1857, %v1571
        %v1875 = vsel %vm1868, %v1858, %v1573
        %v1876 = vsel %vm1868, %v1859, %v1575
        %v1877 = vsel %vm1868, %v1860, %v1577
        %v1878 = vsel %vm1868, %v1861, %v1579
        %v1879 = vsel %vm1868, %v1862, %v1581
        %v1880 = vsel %vm1868, %v1863, %v1583
        %v1881 = vsel %vm1868, %v1864, %v1585
        %v1882 = vsel %vm1868, %v1865, %v1587
        %v1883 = vsel %vm1868, %v1866, %v1589
        %v1884 = vsel %vm1868, %v1867, %v1591
        %vm1885 = vcmask 326656
        %v1886 = vsel %vm1885, %v1869, %v1614
        %v1887 = vsel %vm1885, %v1870, %v1616
        %v1888 = vsel %vm1885, %v1871, %v1618
        %v1889 = vsel %vm1885, %v1872, %v1620
        %v1890 = vsel %vm1885, %v1873, %v1622
        %v1891 = vsel %vm1885, %v1874, %v1624
        %v1892 = vsel %vm1885, %v1875, %v1626
        %v1893 = vsel %vm1885, %v1876, %v1628
        %v1894 = vsel %vm1885, %v1877, %v1630
        %v1895 = vsel %vm1885, %v1878, %v1632
        %v1896 = vsel %vm1885, %v1879, %v1634
        %v1897 = vsel %vm1885, %v1880, %v1636
        %v1898 = vsel %vm1885, %v1881, %v1638
        %v1899 = vsel %vm1885, %v1882, %v1640
        %v1900 = vsel %vm1885, %v1883, %v1642
        %v1901 = vsel %vm1885, %v1884, %v1644
        %vm1902 = vcmask 392192
        %v1903 = vsel %vm1902, %v1886, %v1664
        %v1904 = vsel %vm1902, %v1887, %v1666
        %v1905 = vsel %vm1902, %v1888, %v1668
        %v1906 = vsel %vm1902, %v1889, %v1670
        %v1907 = vsel %vm1902, %v1890, %v1672
        %v1908 = vsel %vm1902, %v1891, %v1674
        %v1909 = vsel %vm1902, %v1892, %v1676
        %v1910 = vsel %vm1902, %v1893, %v1678
        %v1911 = vsel %vm1902, %v1894, %v1680
        %v1912 = vsel %vm1902, %v1895, %v1682
        %v1913 = vsel %vm1902, %v1896, %v1684
        %v1914 = vsel %vm1902, %v1897, %v1686
        %v1915 = vsel %vm1902, %v1898, %v1688
        %v1916 = vsel %vm1902, %v1899, %v1690
        %v1917 = vsel %vm1902, %v1900, %v1692
        %v1918 = vsel %vm1902, %v1901, %v1694
        %vm1919 = vcmask 457728
        %v1920 = vsel %vm1919, %v1903, %v1718
        %v1921 = vsel %vm1919, %v1904, %v1720
        %v1922 = vsel %vm1919, %v1905, %v1722
        %v1923 = vsel %vm1919, %v1906, %v1724
        %v1924 = vsel %vm1919, %v1907, %v1726
        %v1925 = vsel %vm1919, %v1908, %v1728
        %v1926 = vsel %vm1919, %v1909, %v1730
        %v1927 = vsel %vm1919, %v1910, %v1732
        %v1928 = vsel %vm1919, %v1911, %v1734
        %v1929 = vsel %vm1919, %v1912, %v1736
        %v1930 = vsel %vm1919, %v1913, %v1738
        %v1931 = vsel %vm1919, %v1914, %v1740
        %v1932 = vsel %vm1919, %v1915, %v1742
        %v1933 = vsel %vm1919, %v1916, %v1744
        %v1934 = vsel %vm1919, %v1917, %v1746
        %v1935 = vsel %vm1919, %v1918, %v1748
        %vm1936 = vcmask 523264
        %v1937 = vsel %vm1936, %v1920, %v1771
        %v1938 = vsel %vm1936, %v1921, %v1773
        %v1939 = vsel %vm1936, %v1922, %v1775
        %v1940 = vsel %vm1936, %v1923, %v1777
        %v1941 = vsel %vm1936, %v1924, %v1779
        %v1942 = vsel %vm1936, %v1925, %v1781
        %v1943 = vsel %vm1936, %v1926, %v1783
        %v1944 = vsel %vm1936, %v1927, %v1785
        %v1945 = vsel %vm1936, %v1928, %v1787
        %v1946 = vsel %vm1936, %v1929, %v1789
        %v1947 = vsel %vm1936, %v1930, %v1791
        %v1948 = vsel %vm1936, %v1931, %v1793
        %v1949 = vsel %vm1936, %v1932, %v1795
        %v1950 = vsel %vm1936, %v1933, %v1797
        %v1951 = vsel %vm1936, %v1934, %v1799
        %v1952 = vsel %vm1936, %v1935, %v1801
        %s1953 = smul.u32 %s1269, 16
        %s1954 = scalar_lea.vmem %s266, %s1953
        %v1955 = vld [vmem:[%s1954] sm:$0xff]
        %v1956 = vld [vmem:[%s1954 + $0x8] sm:$0xff]
        %v1957 = vld [vmem:[%s1954 + $0x10] sm:$0xff]
        %v1958 = vld [vmem:[%s1954 + $0x18] sm:$0xff]
        %v1959 = vld [vmem:[%s1954 + $0x20] sm:$0xff]
        %v1960 = vld [vmem:[%s1954 + $0x28] sm:$0xff]
        %v1961 = vld [vmem:[%s1954 + $0x30] sm:$0xff]
        %v1962 = vld [vmem:[%s1954 + $0x38] sm:$0xff]
        %v1963 = vld [vmem:[%s1954 + $0x40] sm:$0xff]
        %v1964 = vld [vmem:[%s1954 + $0x48] sm:$0xff]
        %v1965 = vld [vmem:[%s1954 + $0x50] sm:$0xff]
        %v1966 = vld [vmem:[%s1954 + $0x58] sm:$0xff]
        %v1967 = vld [vmem:[%s1954 + $0x60] sm:$0xff]
        %v1968 = vld [vmem:[%s1954 + $0x68] sm:$0xff]
        %v1969 = vld [vmem:[%s1954 + $0x70] sm:$0xff]
        %v1970 = vld [vmem:[%s1954 + $0x78] sm:$0xff]
        %v1972 = vlaneseq
        %v1973 = vshrl.u32 %v1972, 7
        %v1974 = vsub.s32 0, %v1973
        %v1975 = vrot.slane %v337, %v1974
        %vm1977 = vcmask 588800
        %v1979 = vsel %vm1977, %v1937, 0
        %v1982 = vsel %vm1977, %v1938, 0
        %v1985 = vsel %vm1977, %v1939, 0
        %v1988 = vsel %vm1977, %v1940, 0
        %v1991 = vsel %vm1977, %v1941, 0
        %v1994 = vsel %vm1977, %v1942, 0
        %v1997 = vsel %vm1977, %v1943, 0
        %v2000 = vsel %vm1977, %v1944, 0
        %v2003 = vsel %vm1977, %v1945, 0
        %v2006 = vsel %vm1977, %v1946, 0
        %v2009 = vsel %vm1977, %v1947, 0
        %v2012 = vsel %vm1977, %v1948, 0
        %v2015 = vsel %vm1977, %v1949, 0
        %v2018 = vsel %vm1977, %v1950, 0
        %v2021 = vsel %vm1977, %v1951, 0
        %v2024 = vsel %vm1977, %v1952, 0
        %2026 = vmatprep.subr.mxu0 0.0
        %2027 = vmatpush1.msra.mxu0 %v328
        %2028 = vmatprep.subr.mxu0 0.0
        %2029 = vmatpush1.msra.mxu0 %v329
        %2030 = vmatprep.subr.mxu0 0.0
        %2031 = vmatpush1.msra.mxu0 %v330
        %2032 = vmatprep.subr.mxu0 0.0
        %2033 = vmatpush1.msra.mxu0 %v331
        %2034 = vmatprep.subr.mxu0 0.0
        %2035 = vmatpush1.msra.mxu0 %v332
        %2036 = vmatprep.subr.mxu0 0.0
        %2037 = vmatpush1.msra.mxu0 %v333
        %2038 = vmatprep.subr.mxu0 0.0
        %2039 = vmatpush1.msra.mxu0 %v334
        %2040 = vmatprep.subr.mxu0 0.0
        %2041 = vmatpush1.msra.mxu0 %v335
        %2042 = vmatprep.subr.mxu0 0.0
        %2043 = vmatpush1.msra.mxu0 %v336
        %2044 = vmatprep.subr.mxu0 0.0
        %2045 = vmatpush1.msra.mxu0 0.0
        %2046 = vmatprep.subr.mxu0 0.0
        %2047 = vmatpush1.msra.mxu0 0.0
        %2048 = vmatprep.subr.mxu0 0.0
        %2049 = vmatpush1.msra.mxu0 0.0
        %2050 = vmatprep.subr.mxu0 0.0
        %2051 = vmatpush1.msra.mxu0 0.0
        %2052 = vmatprep.subr.mxu0 0.0
        %2053 = vmatpush1.msra.mxu0 0.0
        %2054 = vmatprep.subr.mxu0 0.0
        %2055 = vmatpush1.msra.mxu0 0.0
        %2056 = vmatprep.subr.mxu0 0.0
        %2057 = vmatpush1.msra.mxu0 0.0
        %2058 = vmatprep.subr.mxu0 0.0
        %2059 = vmatpush1.msra.mxu0 0.0
        %2060 = vmatprep.subr.mxu0 0.0
        %2061 = vmatpush1.msra.mxu0 0.0
        %2062 = vmatprep.subr.mxu0 0.0
        %2063 = vmatpush1.msra.mxu0 0.0
        %2064 = vmatprep.subr.mxu0 0.0
        %2065 = vmatpush1.msra.mxu0 0.0
        %2066 = vmatprep.subr.mxu0 0.0
        %2067 = vmatpush1.msra.mxu0 0.0
        %2068 = vmatprep.subr.mxu0 0.0
        %2069 = vmatpush1.msra.mxu0 0.0
        %2070 = vmatprep.subr.mxu0 0.0
        %2071 = vmatpush1.msra.mxu0 0.0
        %2072 = vmatprep.subr.mxu0 0.0
        %2073 = vmatpush1.msra.mxu0 0.0
        %2074 = vmatprep.subr.mxu0 0.0
        %2075 = vmatpush1.msra.mxu0 0.0
        %2076 = vmatprep.subr.mxu0 0.0
        %2077 = vmatpush1.msra.mxu0 0.0
        %2078 = vmatprep.subr.mxu0 0.0
        %2079 = vmatpush1.msra.mxu0 0.0
        %2080 = vmatprep.subr.mxu0 0.0
        %2081 = vmatpush1.msra.mxu0 0.0
        %2082 = vmatprep.subr.mxu0 0.0
        %2083 = vmatpush1.msra.mxu0 0.0
        %2084 = vmatprep.subr.mxu0 0.0
        %2085 = vmatpush1.msra.mxu0 0.0
        %2086 = vmatprep.subr.mxu0 0.0
        %2087 = vmatpush1.msra.mxu0 0.0
        %2088 = vmatprep.subr.mxu0 0.0
        %2089 = vmatpush1.msra.mxu0 0.0
        %2090 = vmatprep.mubr.f32.mxu0 0.0
        %2091 = vmatmul.mubr.f32.gmra.mrb[0].mxu0 %v1979
        %v2092 = vpop.f32.mrb[0].mxu0
        %v2093 = vadd.f32 %v1975, %v2092
        %v2094 = vpop.f32.mrb[0].mxu0
        %2095 = vmatprep.mubr.f32.mxu0 0.0
        %2096 = vmatmul.mubr.f32.gmra.mrb[0].mxu0 %v1982
        %v2097 = vpop.f32.mrb[0].mxu0
        %v2098 = vadd.f32 %v1975, %v2097
        %v2099 = vpop.f32.mrb[0].mxu0
        %2100 = vmatprep.mubr.f32.mxu0 0.0
        %2101 = vmatmul.mubr.f32.gmra.mrb[0].mxu0 %v1985
        %v2102 = vpop.f32.mrb[0].mxu0
        %v2103 = vadd.f32 %v1975, %v2102
        %v2104 = vpop.f32.mrb[0].mxu0
        %2105 = vmatprep.mubr.f32.mxu0 0.0
        %2106 = vmatmul.mubr.f32.gmra.mrb[0].mxu0 %v1988
        %v2107 = vpop.f32.mrb[0].mxu0
        %v2108 = vadd.f32 %v1975, %v2107
        %v2109 = vpop.f32.mrb[0].mxu0
        %2110 = vmatprep.mubr.f32.mxu0 0.0
        %2111 = vmatmul.mubr.f32.gmra.mrb[0].mxu0 %v1991
        %v2112 = vpop.f32.mrb[0].mxu0
        %v2113 = vadd.f32 %v1975, %v2112
        %v2114 = vpop.f32.mrb[0].mxu0
        %2115 = vmatprep.mubr.f32.mxu0 0.0
        %2116 = vmatmul.mubr.f32.gmra.mrb[0].mxu0 %v1994
        %v2117 = vpop.f32.mrb[0].mxu0
        %v2118 = vadd.f32 %v1975, %v2117
        %v2119 = vpop.f32.mrb[0].mxu0
        %2120 = vmatprep.mubr.f32.mxu0 0.0
        %2121 = vmatmul.mubr.f32.gmra.mrb[0].mxu0 %v1997
        %v2122 = vpop.f32.mrb[0].mxu0
        %v2123 = vadd.f32 %v1975, %v2122
        %v2124 = vpop.f32.mrb[0].mxu0
        %2125 = vmatprep.mubr.f32.mxu0 0.0
        %2126 = vmatmul.mubr.f32.gmra.mrb[0].mxu0 %v2000
        %v2127 = vpop.f32.mrb[0].mxu0
        %v2128 = vadd.f32 %v1975, %v2127
        %v2129 = vpop.f32.mrb[0].mxu0
        %2130 = vmatprep.mubr.f32.mxu0 0.0
        %2131 = vmatmul.mubr.f32.gmra.mrb[0].mxu0 %v2003
        %v2132 = vpop.f32.mrb[0].mxu0
        %v2133 = vadd.f32 %v1975, %v2132
        %v2134 = vpop.f32.mrb[0].mxu0
        %2135 = vmatprep.mubr.f32.mxu0 0.0
        %2136 = vmatmul.mubr.f32.gmra.mrb[0].mxu0 %v2006
        %v2137 = vpop.f32.mrb[0].mxu0
        %v2138 = vadd.f32 %v1975, %v2137
        %v2139 = vpop.f32.mrb[0].mxu0
        %2140 = vmatprep.mubr.f32.mxu0 0.0
        %2141 = vmatmul.mubr.f32.gmra.mrb[0].mxu0 %v2009
        %v2142 = vpop.f32.mrb[0].mxu0
        %v2143 = vadd.f32 %v1975, %v2142
        %v2144 = vpop.f32.mrb[0].mxu0
        %2145 = vmatprep.mubr.f32.mxu0 0.0
        %2146 = vmatmul.mubr.f32.gmra.mrb[0].mxu0 %v2012
        %v2147 = vpop.f32.mrb[0].mxu0
        %v2148 = vadd.f32 %v1975, %v2147
        %v2149 = vpop.f32.mrb[0].mxu0
        %2150 = vmatprep.mubr.f32.mxu0 0.0
        %2151 = vmatmul.mubr.f32.gmra.mrb[0].mxu0 %v2015
        %v2152 = vpop.f32.mrb[0].mxu0
        %v2153 = vadd.f32 %v1975, %v2152
        %v2154 = vpop.f32.mrb[0].mxu0
        %2155 = vmatprep.mubr.f32.mxu0 0.0
        %2156 = vmatmul.mubr.f32.gmra.mrb[0].mxu0 %v2018
        %v2157 = vpop.f32.mrb[0].mxu0
        %v2158 = vadd.f32 %v1975, %v2157
        %v2159 = vpop.f32.mrb[0].mxu0
        %2160 = vmatprep.mubr.f32.mxu0 0.0
        %2161 = vmatmul.mubr.f32.gmra.mrb[0].mxu0 %v2021
        %v2162 = vpop.f32.mrb[0].mxu0
        %v2163 = vadd.f32 %v1975, %v2162
        %v2164 = vpop.f32.mrb[0].mxu0
        %2165 = vmatprep.mubr.f32.mxu0 0.0
        %2166 = vmatmul.mubr.f32.gmra.mrb[0].mxu0 %v2024
        %v2167 = vpop.f32.mrb[0].mxu0
        %v2168 = vadd.f32 %v1975, %v2167
        %v2169 = vpop.f32.mrb[0].mxu0
        %2170 = vdwg.mxu0
        %v2171 = vadd.f32 %v2093, %v1955
        %v2172 = vadd.f32 %v2098, %v1956
        %v2173 = vadd.f32 %v2103, %v1957
        %v2174 = vadd.f32 %v2108, %v1958
        %v2175 = vadd.f32 %v2113, %v1959
        %v2176 = vadd.f32 %v2118, %v1960
        %v2177 = vadd.f32 %v2123, %v1961
        %v2178 = vadd.f32 %v2128, %v1962
        %v2179 = vadd.f32 %v2133, %v1963
        %v2180 = vadd.f32 %v2138, %v1964
        %v2181 = vadd.f32 %v2143, %v1965
        %v2182 = vadd.f32 %v2148, %v1966
        %v2183 = vadd.f32 %v2153, %v1967
        %v2184 = vadd.f32 %v2158, %v1968
        %v2185 = vadd.f32 %v2163, %v1969
        %v2186 = vadd.f32 %v2168, %v1970
        %v2187 = vmax.f32 %v2171, 0.0
        %v2188 = vmax.f32 %v2172, 0.0
        %v2189 = vmax.f32 %v2173, 0.0
        %v2190 = vmax.f32 %v2174, 0.0
        %v2191 = vmax.f32 %v2175, 0.0
        %v2192 = vmax.f32 %v2176, 0.0
        %v2193 = vmax.f32 %v2177, 0.0
        %v2194 = vmax.f32 %v2178, 0.0
        %v2195 = vmax.f32 %v2179, 0.0
        %v2196 = vmax.f32 %v2180, 0.0
        %v2197 = vmax.f32 %v2181, 0.0
        %v2198 = vmax.f32 %v2182, 0.0
        %v2199 = vmax.f32 %v2183, 0.0
        %v2200 = vmax.f32 %v2184, 0.0
        %v2201 = vmax.f32 %v2185, 0.0
        %v2202 = vmax.f32 %v2186, 0.0
        %s2203 = scalar_lea.vmem %s271, %s1953
        %2204 = vst.msk [vmem:[%s2203] sm:$0xff] %vm272, %v2187
        %2205 = vst.msk [vmem:[%s2203 + $0x8] sm:$0xff] %vm272, %v2188
        %2206 = vst.msk [vmem:[%s2203 + $0x10] sm:$0xff] %vm272, %v2189
        %2207 = vst.msk [vmem:[%s2203 + $0x18] sm:$0xff] %vm272, %v2190
        %2208 = vst.msk [vmem:[%s2203 + $0x20] sm:$0xff] %vm272, %v2191
        %2209 = vst.msk [vmem:[%s2203 + $0x28] sm:$0xff] %vm272, %v2192
        %2210 = vst.msk [vmem:[%s2203 + $0x30] sm:$0xff] %vm272, %v2193
        %2211 = vst.msk [vmem:[%s2203 + $0x38] sm:$0xff] %vm272, %v2194
        %2212 = vst.msk [vmem:[%s2203 + $0x40] sm:$0xff] %vm272, %v2195
        %2213 = vst.msk [vmem:[%s2203 + $0x48] sm:$0xff] %vm272, %v2196
        %2214 = vst.msk [vmem:[%s2203 + $0x50] sm:$0xff] %vm272, %v2197
        %2215 = vst.msk [vmem:[%s2203 + $0x58] sm:$0xff] %vm272, %v2198
        %2216 = vst.msk [vmem:[%s2203 + $0x60] sm:$0xff] %vm272, %v2199
        %2217 = vst.msk [vmem:[%s2203 + $0x68] sm:$0xff] %vm272, %v2200
        %2218 = vst.msk [vmem:[%s2203 + $0x70] sm:$0xff] %vm272, %v2201
        %2219 = vst.msk [vmem:[%s2203 + $0x78] sm:$0xff] %vm272, %v2202
      $region56: #{basic_block.1} parent=43 // loop_footer
        %s1268 = sadd.s32 1, %s1264
      $region57: #{basic_block.1} parent=43 // loop_footer_branch
        %1263 = sbr.rel target = $region53
      $region58: #{basic_block.1} parent=43 // loop_exit
        _
      %p2220 = scmp.lt.s32.totalorder %s17, 1
      %s2221 = scalar_select %p2220, %s17, 1
      %s2222 = smul.addr %s2221, 32
      %s2223 = smul.addr %s2222, 8
      %s2224 = scalar_lea.vmem %s6, %s2223
      // Predicated region
      $region59: #{basic_block.1} parent=43 // pred_check
        %p2225 = pneg %p171
      $region60: #{basic_block.1} parent=43 // pred_check_branch
        %2227 = sbr.rel (%p2225) target = $region62
      $region61: #{basic_block.1} parent=43 // pred_region
        _
      $region62: #{basic_block.1} parent=43 // pred_fallthru
        _
    $region44: #{basic_block.1} parent=5 // pred_fallthru
      _
    %p2228 = scmp.le.s32.totalorder 2, %s12
    // Predicated region
    $region63: #{basic_block.1} parent=5 // pred_check
      %p2229 = pneg %p2228
    $region64: #{basic_block.1} parent=5 // pred_check_branch
      %2231 = sbr.rel (%p2229) target = $region66
    $region65: #{basic_block.1} parent=5 // pred_region
      %s2232 = ssub.s32 %s12, 2
      // Predicated region
      $region67: #{basic_block.1} parent=65 // pred_check
        %p2233 = pneg %p177
      $region68: #{basic_block.1} parent=65 // pred_check_branch
        %2235 = sbr.rel (%p2233) target = $region70
      $region69: #{basic_block.1} parent=65 // pred_region
        %p2236 = scmp.lt.s32.totalorder %s18, 1
        %s2237 = scalar_select %p2236, %s18, 1
        %s2238 = smul.addr %s2237, 32
        %s2239 = smul.addr %s2238, 8
        %s2240 = scalar_lea.vmem %s6, %s2239
      $region70: #{basic_block.1} parent=65 // pred_fallthru
        _
    $region66: #{basic_block.1} parent=5 // pred_fallthru
      _
  $region6: #{basic_block.1} parent=0 // loop_footer
    %s16 = sadd.s32 1, %s12
  $region7: #{basic_block.1} parent=0 // loop_footer_branch
    %11 = sbr.rel target = $region3
  $region8: #{basic_block.1} parent=0 // loop_exit
    _

</llo_original>
